<compile_context>
chip_gen: v6e
topology: v6e:2x2x1
jax: 0.10.0
libtpu: 0.0.40
codegen_flags: <defaults>
</compile_context>

<pallas_src>
import functools

import jax
import jax.numpy as jnp
from jax.experimental import pallas as pl
from jax.experimental.pallas import tpu as pltpu

BN_EPS = 1e-5
LANE = 128
NODE_PAD = 16          # bf16 sublane packing: pad per-graph node dim to 16


def _round_up(x, m):
    return ((x + m - 1) // m) * m


def pcgcnn_kernel(x_ref, auxr_ref, auxc_ref,
                  w_in_ref, b_in_ref, w_hid_ref, b_hid_ref,
                  gamma_ref, beta_ref, w_out_ref, b_out_ref,
                  out_ref, *, similarity_threshold, hidden, nodes_per_graph):
    N, _ = x_ref.shape
    Hp = w_in_ref.shape[1]                      # lane-padded hidden width (128)
    num_layers = w_hid_ref.shape[0]
    H = hidden                                  # true hidden width (<= Hp // 2)
    Lp = nodes_per_graph
    B = N // Lp

    x = x_ref[...]                              # [N, F] f32 (PPR already prepended)
    aux_r = auxr_ref[...]                       # [N, 7]: valid, sat_type, graph_id, feat_n[0:4]
    aux_c = auxc_ref[...]                       # [7, N]: same data, lane-oriented
    valid_r = aux_r[:, 0:1]                     # [N, 1]
    stype_r = aux_r[:, 1:2]
    gid_r = aux_r[:, 2:3]
    valid_c = aux_c[0:1, :]                     # [1, N]
    stype_c = aux_c[1:2, :]
    gid_c = aux_c[2:3, :]

    # ---------- fused graph construction: dense block-diagonal [N, N] adjacency ----------
    # cosine similarity of F.normalize(feat[:, :4]) via 4 VPU broadcast FMAs (no MXU, no
    # transpose -- the lane-oriented copy arrives via aux_c).
    cos_sim = (aux_r[:, 3:4] * aux_c[3:4, :] + aux_r[:, 4:5] * aux_c[4:5, :]
               + aux_r[:, 5:6] * aux_c[5:6, :] + aux_r[:, 6:7] * aux_c[6:7, :])
    row_id = jax.lax.broadcasted_iota(jnp.int32, (N, N), 0)
    col_id = jax.lax.broadcasted_iota(jnp.int32, (N, N), 1)
    connect = (cos_sim > similarity_threshold) | (stype_r == stype_c)
    keep = (connect & (gid_r == gid_c) & (row_id != col_id)
            & (valid_r > 0.5) & (valid_c > 0.5))        # symmetric, block-diag, no self loops
    adj = jnp.where(keep, 1.0, 0.0)
    deg = jnp.sum(adj, axis=-1, keepdims=True)
    a_norm = adj / jnp.maximum(deg, 1.0)                # exact mean-norm; zero-deg -> 0 agg

    # ---------- shared-BatchNorm constants (training mode: batch statistics) ----------
    n_valid = jnp.maximum(jnp.sum(valid_r, axis=0, keepdims=True), 1.0)    # [1, 1]
    inv_n = 1.0 / n_valid                                                  # exact reciprocal
    gamma = gamma_ref[...]                               # [1, Hp], zero on padded lanes
    beta = beta_ref[...]

    def batch_norm(h):
        # two-pass (mean, then centered second moment) over valid nodes; biased variance.
        mean = jnp.sum(h * valid_r, axis=0, keepdims=True) * inv_n
        d = (h - mean) * valid_r
        var = jnp.sum(d * d, axis=0, keepdims=True) * inv_n
        return gamma * (h - mean) * jax.lax.rsqrt(var + BN_EPS) + beta

    # ---------- input SAGEConv + ReLU + shared BN ----------
    # PyG SAGEConv(aggr='mean'): lin_l(mean_{j in N(i)} h_j) + lin_r(h_i); bias in lin_l.
    agg0 = jnp.dot(a_norm, x, preferred_element_type=jnp.float32)          # [N, F] f32 MXU
    z0 = jnp.concatenate([agg0, x], axis=-1).astype(jnp.bfloat16)          # [N, 2F]
    h = jnp.maximum(jnp.dot(z0, w_in_ref[...],
                            preferred_element_type=jnp.float32) + b_in_ref[...], 0.0)
    h = batch_norm(h)

    # ---------- hidden SAGEConv layers (static unroll) ----------
    # true-width [agg | h] packing: K = 2H <= 128 -> single MXU pass per layer everywhere.
    for layer in range(num_layers):
        agg = jnp.dot(a_norm, h, preferred_element_type=jnp.float32)       # [N, Hp] f32 MXU
        z = jnp.concatenate([agg[:, :H], h[:, :H]], axis=-1).astype(jnp.bfloat16)  # [N, 2H]
        h = jnp.maximum(jnp.dot(z, w_hid_ref[layer],
                                preferred_element_type=jnp.float32) + b_hid_ref[layer], 0.0)
        h = batch_norm(h)

    # ---------- global_mean_pool over valid nodes + output linear ----------
    hm = (h * valid_r).reshape(B, Lp, Hp)
    cnt = jnp.sum(valid_r.reshape(B, Lp, 1), axis=1)                       # [B, 1]
    pooled = jnp.sum(hm, axis=1) / jnp.maximum(cnt, 1.0)                   # [B, Hp] exact
    out_ref[...] = (jnp.dot(pooled, w_out_ref[...],
                            preferred_element_type=jnp.float32) + b_out_ref[...])


def pcgcnn_forward(params, h_prev, x_now, meta, pad_mask, similarity_threshold=0.9):
    """One PCGCNN forward step.  x_now: [L_max, B, D] f32, pad_mask: [B, L_max] bool."""
    L, B, D = x_now.shape
    Lp = _round_up(L, NODE_PAD)
    N = B * Lp
    # Dense [N, N] adjacency is VMEM-resident; switch to a block-diagonal / gridded-over-B
    # layout with a two-phase shared-BN reduction before N grows past ~1k (v7x: 64 MiB VMEM).
    assert N <= 1024, "use block-diagonal adjacency + gridded-over-B for larger batches"

    x_bl = jnp.transpose(x_now, (1, 0, 2)).astype(jnp.float32)     # [B, L, D] batch-major
    valid = (~pad_mask).astype(jnp.float32)                        # [B, L]
    sat_type = meta['sat_type'].astype(jnp.float32)                # [B, L]
    if Lp != L:
        x_bl = jnp.pad(x_bl, ((0, 0), (0, Lp - L), (0, 0)))
        valid = jnp.pad(valid, ((0, 0), (0, Lp - L)))
        sat_type = jnp.pad(sat_type, ((0, 0), (0, Lp - L)), constant_values=-1.0)

    if h_prev is not None:
        # TODO(synk): coord.LocalCoordGPU ECEF<->NED transforms of the predicted-pseudorange
        # branch are not available in the provided code; fall back to ppr = first feature.
        ppr = x_bl[:, :, 0:1]
    else:
        ppr = x_bl[:, :, 0:1]
    x_feat = jnp.concatenate([ppr, x_bl], axis=-1).reshape(N, D + 1)       # [N, F], F = D+1

    # tiny per-node aux table (row- and column-oriented): valid, sat_type, graph_id,
    # F.normalize(feat[:, :4]) -- replaces 5 separate mask/meta inputs of the old kernel.
    feat4 = x_feat[:, :4]
    nrm = jnp.sqrt(jnp.sum(feat4 * feat4, axis=-1, keepdims=True))
    feat_n = feat4 / jnp.maximum(nrm, 1e-12)                               # F.normalize eps
    gid = jnp.repeat(jnp.arange(B, dtype=jnp.float32), Lp)[:, None]        # [N, 1]
    aux_r = jnp.concatenate([valid.reshape(N, 1), sat_type.reshape(N, 1), gid, feat_n],
                            axis=-1)                                       # [N, 7]
    aux_c = aux_r.T                                                        # [7, N]

    inputs = (x_feat, aux_r, aux_c,
              params['w_in_packed'], params['b_in'],
              params['w_hid_packed'], params['b_hid'],
              params['gamma'], params['beta'],
              params['w_out'], params['b_out'])

    out_pad = params['w_out'].shape[1]
    kern = functools.partial(pcgcnn_kernel,
                             similarity_threshold=float(similarity_threshold),
                             hidden=int(params['hidden']),
                             nodes_per_graph=int(Lp))
    vmem = pl.BlockSpec(memory_space=pltpu.MemorySpace.VMEM)
    # Single whole-batch invocation: the shared BatchNorm couples every graph of the batch.
    # A time-sequence driver would add a leading grid axis here with constant-index weight
    # BlockSpecs so the (already lane-padded) weights stay resident across steps.
    out_padded = pl.pallas_call(
        kern,
        out_shape=jax.ShapeDtypeStruct((B, out_pad), jnp.float32),
        in_specs=[vmem] * len(inputs),
        out_specs=vmem,
        compiler_params=pltpu.CompilerParams(vmem_limit_bytes=32 * 1024 * 1024),
    )(*inputs)
    return out_padded[:, :params['out_channels']]                          # drop lane padding


def init_params(key, in_channels, hidden, out_channels, num_layers=2):
    """Deterministic synthetic parameters (natural shapes, pre-transposed [in, out])."""
    keys = jax.random.split(key, 6)

    def lin(k, fan_in, fan_out):
        return (jax.random.normal(k, (fan_in, fan_out), jnp.float32)
                / jnp.sqrt(jnp.float32(fan_in)))

    return {
        'w_in_l_t': lin(keys[0], in_channels, hidden),     # lin_l of input SAGEConv (has bias)
        'w_in_r_t': lin(keys[1], in_channels, hidden),     # lin_r (root weight, no bias)
        'b_in': jnp.full((1, hidden), 0.01, jnp.float32),
        'w_l_t': jnp.stack([lin(jax.random.fold_in(keys[2], l), hidden, hidden)
                            for l in range(num_layers)]),
        'w_r_t': jnp.stack([lin(jax.random.fold_in(keys[3], l), hidden, hidden)
                            for l in range(num_layers)]),
        'b_l': jnp.full((num_layers, 1, hidden), 0.01, jnp.float32),
        'gamma': jnp.ones((1, hidden), jnp.float32),        # shared BatchNorm affine
        'beta': jnp.zeros((1, hidden), jnp.float32),
        'w_out_t': lin(keys[4], hidden, out_channels),
        'b_out': jnp.zeros((1, out_channels), jnp.float32),
    }


def pack_params(raw):
    """Pad output lanes to 128, pack lin_l/lin_r at TRUE K-width (2H), cast MXU weights bf16."""
    H = raw['gamma'].shape[1]
    out_ch = raw['w_out_t'].shape[1]
    Hp = _round_up(H, LANE)
    Op = _round_up(out_ch, LANE)
    assert 2 * H <= Hp, "true-width [agg|h] packing needs 2*hidden <= 128"

    # input layer: [2F, Hp]
    w_in = jnp.concatenate([raw['w_in_l_t'], raw['w_in_r_t']], axis=0)
    w_in = jnp.pad(w_in, ((0, 0), (0, Hp - H))).astype(jnp.bfloat16)

    # hidden layers: [Lyr, 2H, Hp]  -- rows [0,H)=lin_l, [H,2H)=lin_r, outputs lane-padded
    w_hid = jnp.concatenate([raw['w_l_t'], raw['w_r_t']], axis=1)          # [Lyr, 2H, H]
    w_hid = jnp.pad(w_hid, ((0, 0), (0, 0), (0, Hp - H))).astype(jnp.bfloat16)

    return {
        'w_in_packed': w_in,
        'b_in': jnp.pad(raw['b_in'], ((0, 0), (0, Hp - H))),
        'w_hid_packed': w_hid,
        'b_hid': jnp.pad(raw['b_l'], ((0, 0), (0, 0), (0, Hp - H))),
        'gamma': jnp.pad(raw['gamma'], ((0, 0), (0, Hp - H))),             # 0 on padded lanes
        'beta': jnp.pad(raw['beta'], ((0, 0), (0, Hp - H))),
        'w_out': jnp.pad(raw['w_out_t'], ((0, Hp - H), (0, Op - out_ch))), # f32 (tiny)
        'b_out': jnp.pad(raw['b_out'], ((0, 0), (0, Op - out_ch))),
        'hidden': H,
        'out_channels': out_ch,
    }


if __name__ == "__main__":
    key = jax.random.PRNGKey(0)
    B, L, D = 2, 8, 7                    # in_channels = D + 1 = 8 (PPR concat)
    hidden, out_ch, num_layers = 32, 3, 2

    k_x, k_t, k_p = jax.random.split(key, 3)
    x_now = jax.random.normal(k_x, (L, B, D), jnp.float32)        # [L_max, B, D]
    pad_mask = jnp.zeros((B, L), dtype=bool)
    pad_mask = pad_mask.at[0, 6:].set(True).at[1, 7:].set(True)   # ragged graphs
    meta = {'sat_type': jax.random.randint(k_t, (B, L), 0, 4)}
    params = pack_params(init_params(k_p, D + 1, hidden, out_ch, num_layers))

    out = pcgcnn_forward(params, None, x_now, meta, pad_mask, similarity_threshold=0.9)
    out = jax.block_until_ready(out)
    assert out.shape == (B, out_ch), out.shape
    assert bool(jnp.all(jnp.isfinite(out)))
    print("KERNEL_OK")
</pallas_src>

<mosaic_0001>
module attributes {stable_mosaic.version = 11 : i64} {
  func.func @pcgcnn_kernel(%arg0: memref<32x8xf32, #tpu.memory_space<vmem>>, %arg1: memref<32x7xf32, #tpu.memory_space<vmem>>, %arg2: memref<7x32xf32, #tpu.memory_space<vmem>>, %arg3: memref<16x128xbf16, #tpu.memory_space<vmem>>, %arg4: memref<1x128xf32, #tpu.memory_space<vmem>>, %arg5: memref<2x64x128xbf16, #tpu.memory_space<vmem>>, %arg6: memref<2x1x128xf32, #tpu.memory_space<vmem>>, %arg7: memref<1x128xf32, #tpu.memory_space<vmem>>, %arg8: memref<1x128xf32, #tpu.memory_space<vmem>>, %arg9: memref<128x128xf32, #tpu.memory_space<vmem>>, %arg10: memref<1x128xf32, #tpu.memory_space<vmem>>, %arg11: memref<2x128xf32, #tpu.memory_space<vmem>>) attributes {dimension_semantics = [], scalar_prefetch = 0 : i64, scratch_operands = 0 : i64, tpu.core_type = #tpu.core_type<tc>} {
    %c0 = arith.constant 0 : index
    %c0_0 = arith.constant 0 : index
    %0 = vector.load %arg0[%c0, %c0_0] : memref<32x8xf32, #tpu.memory_space<vmem>>, vector<32x8xf32>
    %c0_1 = arith.constant 0 : index
    %c0_2 = arith.constant 0 : index
    %1 = vector.load %arg1[%c0_1, %c0_2] : memref<32x7xf32, #tpu.memory_space<vmem>>, vector<32x7xf32>
    %c0_3 = arith.constant 0 : index
    %c0_4 = arith.constant 0 : index
    %2 = vector.load %arg2[%c0_3, %c0_4] : memref<7x32xf32, #tpu.memory_space<vmem>>, vector<7x32xf32>
    %3 = vector.extract_strided_slice %1 {offsets = [0, 0], sizes = [32, 1], strides = [1, 1]} : vector<32x7xf32> to vector<32x1xf32>
    %4 = vector.extract_strided_slice %1 {offsets = [0, 1], sizes = [32, 1], strides = [1, 1]} : vector<32x7xf32> to vector<32x1xf32>
    %5 = vector.extract_strided_slice %1 {offsets = [0, 2], sizes = [32, 1], strides = [1, 1]} : vector<32x7xf32> to vector<32x1xf32>
    %6 = vector.extract_strided_slice %2 {offsets = [0, 0], sizes = [1, 32], strides = [1, 1]} : vector<7x32xf32> to vector<1x32xf32>
    %7 = vector.extract_strided_slice %2 {offsets = [1, 0], sizes = [1, 32], strides = [1, 1]} : vector<7x32xf32> to vector<1x32xf32>
    %8 = vector.extract_strided_slice %2 {offsets = [2, 0], sizes = [1, 32], strides = [1, 1]} : vector<7x32xf32> to vector<1x32xf32>
    %9 = vector.extract_strided_slice %1 {offsets = [0, 3], sizes = [32, 1], strides = [1, 1]} : vector<32x7xf32> to vector<32x1xf32>
    %10 = vector.extract_strided_slice %2 {offsets = [3, 0], sizes = [1, 32], strides = [1, 1]} : vector<7x32xf32> to vector<1x32xf32>
    %11 = vector.broadcast %9 : vector<32x1xf32> to vector<32x32xf32>
    %12 = vector.broadcast %10 : vector<1x32xf32> to vector<32x32xf32>
    %13 = arith.mulf %11, %12 : vector<32x32xf32>
    %14 = vector.extract_strided_slice %1 {offsets = [0, 4], sizes = [32, 1], strides = [1, 1]} : vector<32x7xf32> to vector<32x1xf32>
    %15 = vector.extract_strided_slice %2 {offsets = [4, 0], sizes = [1, 32], strides = [1, 1]} : vector<7x32xf32> to vector<1x32xf32>
    %16 = vector.broadcast %14 : vector<32x1xf32> to vector<32x32xf32>
    %17 = vector.broadcast %15 : vector<1x32xf32> to vector<32x32xf32>
    %18 = arith.mulf %16, %17 : vector<32x32xf32>
    %19 = arith.addf %13, %18 : vector<32x32xf32>
    %20 = vector.extract_strided_slice %1 {offsets = [0, 5], sizes = [32, 1], strides = [1, 1]} : vector<32x7xf32> to vector<32x1xf32>
    %21 = vector.extract_strided_slice %2 {offsets = [5, 0], sizes = [1, 32], strides = [1, 1]} : vector<7x32xf32> to vector<1x32xf32>
    %22 = vector.broadcast %20 : vector<32x1xf32> to vector<32x32xf32>
    %23 = vector.broadcast %21 : vector<1x32xf32> to vector<32x32xf32>
    %24 = arith.mulf %22, %23 : vector<32x32xf32>
    %25 = arith.addf %19, %24 : vector<32x32xf32>
    %26 = vector.extract_strided_slice %1 {offsets = [0, 6], sizes = [32, 1], strides = [1, 1]} : vector<32x7xf32> to vector<32x1xf32>
    %27 = vector.extract_strided_slice %2 {offsets = [6, 0], sizes = [1, 32], strides = [1, 1]} : vector<7x32xf32> to vector<1x32xf32>
    %28 = vector.broadcast %26 : vector<32x1xf32> to vector<32x32xf32>
    %29 = vector.broadcast %27 : vector<1x32xf32> to vector<32x32xf32>
    %30 = arith.mulf %28, %29 : vector<32x32xf32>
    %31 = arith.addf %25, %30 : vector<32x32xf32>
    %32 = tpu.iota {dimensions = array<i32: 0>} : vector<32x32xi32>
    %33 = tpu.iota {dimensions = array<i32: 1>} : vector<32x32xi32>
    %cst = arith.constant 0.899999976 : f32
    %34 = vector.broadcast %cst : f32 to vector<32x32xf32>
    %35 = arith.cmpf ogt, %31, %34 : vector<32x32xf32>
    %36 = vector.broadcast %4 : vector<32x1xf32> to vector<32x32xf32>
    %37 = vector.broadcast %7 : vector<1x32xf32> to vector<32x32xf32>
    %38 = arith.cmpf oeq, %36, %37 : vector<32x32xf32>
    %39 = arith.ori %35, %38 : vector<32x32xi1>
    %40 = vector.broadcast %5 : vector<32x1xf32> to vector<32x32xf32>
    %41 = vector.broadcast %8 : vector<1x32xf32> to vector<32x32xf32>
    %42 = arith.cmpf oeq, %40, %41 : vector<32x32xf32>
    %43 = arith.andi %39, %42 : vector<32x32xi1>
    %44 = arith.cmpi ne, %32, %33 : vector<32x32xi32>
    %45 = arith.andi %43, %44 : vector<32x32xi1>
    %cst_5 = arith.constant 5.000000e-01 : f32
    %46 = vector.broadcast %cst_5 : f32 to vector<32x1xf32>
    %47 = arith.cmpf ogt, %3, %46 : vector<32x1xf32>
    %48 = vector.broadcast %47 : vector<32x1xi1> to vector<32x32xi1>
    %49 = arith.andi %45, %48 : vector<32x32xi1>
    %cst_6 = arith.constant 5.000000e-01 : f32
    %50 = vector.broadcast %cst_6 : f32 to vector<1x32xf32>
    %51 = arith.cmpf ogt, %6, %50 : vector<1x32xf32>
    %52 = vector.broadcast %51 : vector<1x32xi1> to vector<32x32xi1>
    %53 = arith.andi %49, %52 : vector<32x32xi1>
    %cst_7 = arith.constant 1.000000e+00 : f32
    %cst_8 = arith.constant 0.000000e+00 : f32
    %54 = vector.broadcast %cst_7 : f32 to vector<32x32xf32>
    %55 = vector.broadcast %cst_8 : f32 to vector<32x32xf32>
    %56 = arith.select %53, %54, %55 : vector<32x32xi1>, vector<32x32xf32>
    %cst_9 = arith.constant dense<0.000000e+00> : vector<32xf32>
    %57 = vector.multi_reduction <add>, %56, %cst_9 [1] : vector<32x32xf32> to vector<32xf32>
    %58 = vector.shape_cast %57 : vector<32xf32> to vector<32x1xf32>
    %cst_10 = arith.constant 1.000000e+00 : f32
    %59 = vector.broadcast %cst_10 : f32 to vector<32x1xf32>
    %60 = arith.maximumf %58, %59 : vector<32x1xf32>
    %61 = vector.broadcast %60 : vector<32x1xf32> to vector<32x32xf32>
    %62 = arith.divf %56, %61 : vector<32x32xf32>
    %cst_11 = arith.constant dense<0.000000e+00> : vector<1xf32>
    %63 = vector.multi_reduction <add>, %3, %cst_11 [0] : vector<32x1xf32> to vector<1xf32>
    %64 = vector.shape_cast %63 : vector<1xf32> to vector<1x1xf32>
    %cst_12 = arith.constant 1.000000e+00 : f32
    %65 = vector.broadcast %cst_12 : f32 to vector<1x1xf32>
    %66 = arith.maximumf %64, %65 : vector<1x1xf32>
    %cst_13 = arith.constant 1.000000e+00 : f32
    %67 = vector.broadcast %cst_13 : f32 to vector<1x1xf32>
    %68 = arith.divf %67, %66 : vector<1x1xf32>
    %c0_14 = arith.constant 0 : index
    %c0_15 = arith.constant 0 : index
    %69 = vector.load %arg7[%c0_14, %c0_15] : memref<1x128xf32, #tpu.memory_space<vmem>>, vector<1x128xf32>
    %c0_16 = arith.constant 0 : index
    %c0_17 = arith.constant 0 : index
    %70 = vector.load %arg8[%c0_16, %c0_17] : memref<1x128xf32, #tpu.memory_space<vmem>>, vector<1x128xf32>
    %cst_18 = arith.constant dense<0.000000e+00> : vector<32x8xf32>
    %71 = tpu.matmul %62, %0, %cst_18 {dimension_numbers = #tpu.dot_dimension_numbers<[1], [0], [0], [1], [0, 0, 1, 1], [], []>} : vector<32x32xf32>, vector<32x8xf32>, vector<32x8xf32> -> vector<32x8xf32>
    %72 = tpu.concatenate %71, %0 in 1 : vector<32x8xf32>, vector<32x8xf32> -> vector<32x16xf32>
    %73 = arith.truncf %72 : vector<32x16xf32> to vector<32x16xbf16>
    %c0_19 = arith.constant 0 : index
    %c0_20 = arith.constant 0 : index
    %74 = vector.load %arg3[%c0_19, %c0_20] : memref<16x128xbf16, #tpu.memory_space<vmem>>, vector<16x128xbf16>
    %cst_21 = arith.constant dense<0.000000e+00> : vector<32x128xf32>
    %75 = tpu.matmul %73, %74, %cst_21 {dimension_numbers = #tpu.dot_dimension_numbers<[1], [0], [0], [1], [0, 0, 1, 1], [], []>} : vector<32x16xbf16>, vector<16x128xbf16>, vector<32x128xf32> -> vector<32x128xf32>
    %c0_22 = arith.constant 0 : index
    %c0_23 = arith.constant 0 : index
    %76 = vector.load %arg4[%c0_22, %c0_23] : memref<1x128xf32, #tpu.memory_space<vmem>>, vector<1x128xf32>
    %77 = vector.broadcast %76 : vector<1x128xf32> to vector<32x128xf32>
    %78 = arith.addf %75, %77 : vector<32x128xf32>
    %cst_24 = arith.constant 0.000000e+00 : f32
    %79 = vector.broadcast %cst_24 : f32 to vector<32x128xf32>
    %80 = arith.maximumf %78, %79 : vector<32x128xf32>
    %81 = vector.broadcast %3 : vector<32x1xf32> to vector<32x128xf32>
    %82 = arith.mulf %80, %81 : vector<32x128xf32>
    %cst_25 = arith.constant dense<0.000000e+00> : vector<128xf32>
    %83 = vector.multi_reduction <add>, %82, %cst_25 [0] : vector<32x128xf32> to vector<128xf32>
    %84 = vector.shape_cast %83 : vector<128xf32> to vector<1x128xf32>
    %85 = vector.broadcast %68 : vector<1x1xf32> to vector<1x128xf32>
    %86 = arith.mulf %84, %85 : vector<1x128xf32>
    %87 = vector.broadcast %86 : vector<1x128xf32> to vector<32x128xf32>
    %88 = arith.subf %80, %87 : vector<32x128xf32>
    %89 = vector.broadcast %3 : vector<32x1xf32> to vector<32x128xf32>
    %90 = arith.mulf %88, %89 : vector<32x128xf32>
    %91 = arith.mulf %90, %90 : vector<32x128xf32>
    %cst_26 = arith.constant dense<0.000000e+00> : vector<128xf32>
    %92 = vector.multi_reduction <add>, %91, %cst_26 [0] : vector<32x128xf32> to vector<128xf32>
    %93 = vector.shape_cast %92 : vector<128xf32> to vector<1x128xf32>
    %94 = vector.broadcast %68 : vector<1x1xf32> to vector<1x128xf32>
    %95 = arith.mulf %93, %94 : vector<1x128xf32>
    %96 = vector.broadcast %86 : vector<1x128xf32> to vector<32x128xf32>
    %97 = arith.subf %80, %96 : vector<32x128xf32>
    %98 = vector.broadcast %69 : vector<1x128xf32> to vector<32x128xf32>
    %99 = arith.mulf %98, %97 : vector<32x128xf32>
    %cst_27 = arith.constant 9.99999974E-6 : f32
    %100 = vector.broadcast %cst_27 : f32 to vector<1x128xf32>
    %101 = arith.addf %95, %100 : vector<1x128xf32>
    %102 = math.rsqrt %101 : vector<1x128xf32>
    %103 = vector.broadcast %102 : vector<1x128xf32> to vector<32x128xf32>
    %104 = arith.mulf %99, %103 : vector<32x128xf32>
    %105 = vector.broadcast %70 : vector<1x128xf32> to vector<32x128xf32>
    %106 = arith.addf %104, %105 : vector<32x128xf32>
    %cst_28 = arith.constant dense<0.000000e+00> : vector<32x128xf32>
    %107 = tpu.matmul %62, %106, %cst_28 {dimension_numbers = #tpu.dot_dimension_numbers<[1], [0], [0], [1], [0, 0, 1, 1], [], []>} : vector<32x32xf32>, vector<32x128xf32>, vector<32x128xf32> -> vector<32x128xf32>
    %108 = vector.extract_strided_slice %107 {offsets = [0, 0], sizes = [32, 32], strides = [1, 1]} : vector<32x128xf32> to vector<32x32xf32>
    %109 = vector.extract_strided_slice %106 {offsets = [0, 0], sizes = [32, 32], strides = [1, 1]} : vector<32x128xf32> to vector<32x32xf32>
    %110 = tpu.concatenate %108, %109 in 1 : vector<32x32xf32>, vector<32x32xf32> -> vector<32x64xf32>
    %111 = arith.truncf %110 : vector<32x64xf32> to vector<32x64xbf16>
    %c0_29 = arith.constant 0 : index
    %c0_30 = arith.constant 0 : index
    %c0_31 = arith.constant 0 : index
    %112 = vector.load %arg5[%c0_29, %c0_30, %c0_31] : memref<2x64x128xbf16, #tpu.memory_space<vmem>>, vector<1x64x128xbf16>
    %113 = vector.shape_cast %112 : vector<1x64x128xbf16> to vector<64x128xbf16>
    %cst_32 = arith.constant dense<0.000000e+00> : vector<32x128xf32>
    %114 = tpu.matmul %111, %113, %cst_32 {dimension_numbers = #tpu.dot_dimension_numbers<[1], [0], [0], [1], [0, 0, 1, 1], [], []>} : vector<32x64xbf16>, vector<64x128xbf16>, vector<32x128xf32> -> vector<32x128xf32>
    %c0_33 = arith.constant 0 : index
    %c0_34 = arith.constant 0 : index
    %c0_35 = arith.constant 0 : index
    %115 = vector.load %arg6[%c0_33, %c0_34, %c0_35] : memref<2x1x128xf32, #tpu.memory_space<vmem>>, vector<1x1x128xf32>
    %116 = vector.shape_cast %115 : vector<1x1x128xf32> to vector<1x128xf32>
    %117 = vector.broadcast %116 : vector<1x128xf32> to vector<32x128xf32>
    %118 = arith.addf %114, %117 : vector<32x128xf32>
    %cst_36 = arith.constant 0.000000e+00 : f32
    %119 = vector.broadcast %cst_36 : f32 to vector<32x128xf32>
    %120 = arith.maximumf %118, %119 : vector<32x128xf32>
    %121 = vector.broadcast %3 : vector<32x1xf32> to vector<32x128xf32>
    %122 = arith.mulf %120, %121 : vector<32x128xf32>
    %cst_37 = arith.constant dense<0.000000e+00> : vector<128xf32>
    %123 = vector.multi_reduction <add>, %122, %cst_37 [0] : vector<32x128xf32> to vector<128xf32>
    %124 = vector.shape_cast %123 : vector<128xf32> to vector<1x128xf32>
    %125 = vector.broadcast %68 : vector<1x1xf32> to vector<1x128xf32>
    %126 = arith.mulf %124, %125 : vector<1x128xf32>
    %127 = vector.broadcast %126 : vector<1x128xf32> to vector<32x128xf32>
    %128 = arith.subf %120, %127 : vector<32x128xf32>
    %129 = vector.broadcast %3 : vector<32x1xf32> to vector<32x128xf32>
    %130 = arith.mulf %128, %129 : vector<32x128xf32>
    %131 = arith.mulf %130, %130 : vector<32x128xf32>
    %cst_38 = arith.constant dense<0.000000e+00> : vector<128xf32>
    %132 = vector.multi_reduction <add>, %131, %cst_38 [0] : vector<32x128xf32> to vector<128xf32>
    %133 = vector.shape_cast %132 : vector<128xf32> to vector<1x128xf32>
    %134 = vector.broadcast %68 : vector<1x1xf32> to vector<1x128xf32>
    %135 = arith.mulf %133, %134 : vector<1x128xf32>
    %136 = vector.broadcast %126 : vector<1x128xf32> to vector<32x128xf32>
    %137 = arith.subf %120, %136 : vector<32x128xf32>
    %138 = vector.broadcast %69 : vector<1x128xf32> to vector<32x128xf32>
    %139 = arith.mulf %138, %137 : vector<32x128xf32>
    %cst_39 = arith.constant 9.99999974E-6 : f32
    %140 = vector.broadcast %cst_39 : f32 to vector<1x128xf32>
    %141 = arith.addf %135, %140 : vector<1x128xf32>
    %142 = math.rsqrt %141 : vector<1x128xf32>
    %143 = vector.broadcast %142 : vector<1x128xf32> to vector<32x128xf32>
    %144 = arith.mulf %139, %143 : vector<32x128xf32>
    %145 = vector.broadcast %70 : vector<1x128xf32> to vector<32x128xf32>
    %146 = arith.addf %144, %145 : vector<32x128xf32>
    %cst_40 = arith.constant dense<0.000000e+00> : vector<32x128xf32>
    %147 = tpu.matmul %62, %146, %cst_40 {dimension_numbers = #tpu.dot_dimension_numbers<[1], [0], [0], [1], [0, 0, 1, 1], [], []>} : vector<32x32xf32>, vector<32x128xf32>, vector<32x128xf32> -> vector<32x128xf32>
    %148 = vector.extract_strided_slice %147 {offsets = [0, 0], sizes = [32, 32], strides = [1, 1]} : vector<32x128xf32> to vector<32x32xf32>
    %149 = vector.extract_strided_slice %146 {offsets = [0, 0], sizes = [32, 32], strides = [1, 1]} : vector<32x128xf32> to vector<32x32xf32>
    %150 = tpu.concatenate %148, %149 in 1 : vector<32x32xf32>, vector<32x32xf32> -> vector<32x64xf32>
    %151 = arith.truncf %150 : vector<32x64xf32> to vector<32x64xbf16>
    %c1 = arith.constant 1 : index
    %c0_41 = arith.constant 0 : index
    %c0_42 = arith.constant 0 : index
    %152 = vector.load %arg5[%c1, %c0_41, %c0_42] : memref<2x64x128xbf16, #tpu.memory_space<vmem>>, vector<1x64x128xbf16>
    %153 = vector.shape_cast %152 : vector<1x64x128xbf16> to vector<64x128xbf16>
    %cst_43 = arith.constant dense<0.000000e+00> : vector<32x128xf32>
    %154 = tpu.matmul %151, %153, %cst_43 {dimension_numbers = #tpu.dot_dimension_numbers<[1], [0], [0], [1], [0, 0, 1, 1], [], []>} : vector<32x64xbf16>, vector<64x128xbf16>, vector<32x128xf32> -> vector<32x128xf32>
    %c1_44 = arith.constant 1 : index
    %c0_45 = arith.constant 0 : index
    %c0_46 = arith.constant 0 : index
    %155 = vector.load %arg6[%c1_44, %c0_45, %c0_46] : memref<2x1x128xf32, #tpu.memory_space<vmem>>, vector<1x1x128xf32>
    %156 = vector.shape_cast %155 : vector<1x1x128xf32> to vector<1x128xf32>
    %157 = vector.broadcast %156 : vector<1x128xf32> to vector<32x128xf32>
    %158 = arith.addf %154, %157 : vector<32x128xf32>
    %cst_47 = arith.constant 0.000000e+00 : f32
    %159 = vector.broadcast %cst_47 : f32 to vector<32x128xf32>
    %160 = arith.maximumf %158, %159 : vector<32x128xf32>
    %161 = vector.broadcast %3 : vector<32x1xf32> to vector<32x128xf32>
    %162 = arith.mulf %160, %161 : vector<32x128xf32>
    %cst_48 = arith.constant dense<0.000000e+00> : vector<128xf32>
    %163 = vector.multi_reduction <add>, %162, %cst_48 [0] : vector<32x128xf32> to vector<128xf32>
    %164 = vector.shape_cast %163 : vector<128xf32> to vector<1x128xf32>
    %165 = vector.broadcast %68 : vector<1x1xf32> to vector<1x128xf32>
    %166 = arith.mulf %164, %165 : vector<1x128xf32>
    %167 = vector.broadcast %166 : vector<1x128xf32> to vector<32x128xf32>
    %168 = arith.subf %160, %167 : vector<32x128xf32>
    %169 = vector.broadcast %3 : vector<32x1xf32> to vector<32x128xf32>
    %170 = arith.mulf %168, %169 : vector<32x128xf32>
    %171 = arith.mulf %170, %170 : vector<32x128xf32>
    %cst_49 = arith.constant dense<0.000000e+00> : vector<128xf32>
    %172 = vector.multi_reduction <add>, %171, %cst_49 [0] : vector<32x128xf32> to vector<128xf32>
    %173 = vector.shape_cast %172 : vector<128xf32> to vector<1x128xf32>
    %174 = vector.broadcast %68 : vector<1x1xf32> to vector<1x128xf32>
    %175 = arith.mulf %173, %174 : vector<1x128xf32>
    %176 = vector.broadcast %166 : vector<1x128xf32> to vector<32x128xf32>
    %177 = arith.subf %160, %176 : vector<32x128xf32>
    %178 = vector.broadcast %69 : vector<1x128xf32> to vector<32x128xf32>
    %179 = arith.mulf %178, %177 : vector<32x128xf32>
    %cst_50 = arith.constant 9.99999974E-6 : f32
    %180 = vector.broadcast %cst_50 : f32 to vector<1x128xf32>
    %181 = arith.addf %175, %180 : vector<1x128xf32>
    %182 = math.rsqrt %181 : vector<1x128xf32>
    %183 = vector.broadcast %182 : vector<1x128xf32> to vector<32x128xf32>
    %184 = arith.mulf %179, %183 : vector<32x128xf32>
    %185 = vector.broadcast %70 : vector<1x128xf32> to vector<32x128xf32>
    %186 = arith.addf %184, %185 : vector<32x128xf32>
    %187 = vector.broadcast %3 : vector<32x1xf32> to vector<32x128xf32>
    %188 = arith.mulf %186, %187 : vector<32x128xf32>
    %189 = vector.shape_cast %188 : vector<32x128xf32> to vector<2x16x128xf32>
    %190 = vector.shape_cast %3 : vector<32x1xf32> to vector<2x16x1xf32>
    %cst_51 = arith.constant dense<0.000000e+00> : vector<2x1xf32>
    %191 = vector.multi_reduction <add>, %190, %cst_51 [1] : vector<2x16x1xf32> to vector<2x1xf32>
    %cst_52 = arith.constant dense<0.000000e+00> : vector<2x128xf32>
    %192 = vector.multi_reduction <add>, %189, %cst_52 [1] : vector<2x16x128xf32> to vector<2x128xf32>
    %cst_53 = arith.constant 1.000000e+00 : f32
    %193 = vector.broadcast %cst_53 : f32 to vector<2x1xf32>
    %194 = arith.maximumf %191, %193 : vector<2x1xf32>
    %195 = vector.broadcast %194 : vector<2x1xf32> to vector<2x128xf32>
    %196 = arith.divf %192, %195 : vector<2x128xf32>
    %c0_54 = arith.constant 0 : index
    %c0_55 = arith.constant 0 : index
    %197 = vector.load %arg9[%c0_54, %c0_55] : memref<128x128xf32, #tpu.memory_space<vmem>>, vector<128x128xf32>
    %cst_56 = arith.constant dense<0.000000e+00> : vector<2x128xf32>
    %198 = tpu.matmul %196, %197, %cst_56 {dimension_numbers = #tpu.dot_dimension_numbers<[1], [0], [0], [1], [0, 0, 1, 1], [], []>} : vector<2x128xf32>, vector<128x128xf32>, vector<2x128xf32> -> vector<2x128xf32>
    %c0_57 = arith.constant 0 : index
    %c0_58 = arith.constant 0 : index
    %199 = vector.load %arg10[%c0_57, %c0_58] : memref<1x128xf32, #tpu.memory_space<vmem>>, vector<1x128xf32>
    %200 = vector.broadcast %199 : vector<1x128xf32> to vector<2x128xf32>
    %201 = arith.addf %198, %200 : vector<2x128xf32>
    %c0_59 = arith.constant 0 : index
    %c0_60 = arith.constant 0 : index
    %202 = vector.load %arg11[%c0_59, %c0_60] : memref<2x128xf32, #tpu.memory_space<vmem>>, vector<2x128xf32>
    tpu.vector_store %arg11[%c0_59, %c0_60], %201 {strides = array<i32>} : memref<2x128xf32, #tpu.memory_space<vmem>>, vector<2x128xf32>,
    return
  }
}

</mosaic_0001>

<llo_original>
// kernel: tpu_custom_call.1
$region0: #{tpu_custom_call.1}
  #allocation0 [shape = 'u32[]', space=smem, size = 0x4, offset = 0x4, fixed_abs, tag = 'smem constant byte address 0x4 - core index']
  #allocation1 [shape = 'u32[144,128]{1,0:T(1,128)}', space=vmem, size = 0x12000, scoped, tag = 'internal scratch']
  %s0 = inlined_call_operand.vmem [shape: f32[32,8], index: 0, kind: input, shape index: {}]
  %s1 = inlined_call_operand.vmem [shape: f32[32,7], index: 1, kind: input, shape index: {}]
  %s2 = inlined_call_operand.vmem [shape: f32[7,32], index: 2, kind: input, shape index: {}]
  %s3 = inlined_call_operand.vmem [shape: bf16[16,128], index: 3, kind: input, shape index: {}]
  %s4 = inlined_call_operand.vmem [shape: f32[1,128], index: 4, kind: input, shape index: {}]
  %s5 = inlined_call_operand.vmem [shape: bf16[2,64,128], index: 5, kind: input, shape index: {}]
  %s6 = inlined_call_operand.vmem [shape: f32[2,1,128], index: 6, kind: input, shape index: {}]
  %s7 = inlined_call_operand.vmem [shape: f32[1,128], index: 7, kind: input, shape index: {}]
  %s8 = inlined_call_operand.vmem [shape: f32[1,128], index: 8, kind: input, shape index: {}]
  %s9 = inlined_call_operand.hbm [shape: f32[128,128], index: 9, kind: input, shape index: {}]
  %s10 = inlined_call_operand.vmem [shape: f32[1,128], index: 10, kind: input, shape index: {}]
  %s11 = inlined_call_operand.hbm [shape: f32[2,128], index: 11, kind: output, shape index: {}]
  %s12 = sld [smem:[#allocation0]]
  $region58: #{tpu_custom_call.1} parent=0
    _
  %s14 = ssub.s32 1, %s12
  %s15 = scalar_select 0, %s14, %s12
  $region1: #{tpu_custom_call.1} parent=0
    #allocation2 [shape = 'u8[65536]{0}', space=vmem, size = 0x10000, scoped, tag = 'input window, operand 9, single buffered']
    #allocation3 [shape = 's32[1]{0}', space=sflag, size = 0x4, scoped, tag = 'scoped memory for tpu_custom_call.1']
    #allocation4 [shape = 's32[1]{0}', space=sflag, size = 0x4, scoped, tag = 'scoped memory for tpu_custom_call.1']
    #allocation5 [shape = 'u8[1024]{0}', space=vmem, size = 0x400, scoped, tag = 'output window, operand 0, single buffered']
    %16 = vsyncpa [#allocation3], 0
    %17 = vsyncpa [#allocation4], 0
    // Predicated region
    $region2: #{tpu_custom_call.1} parent=1 // pred_check
      _
    $region3: #{tpu_custom_call.1} parent=1 // pred_check_branch
      %19 = sbr.rel (0) target = $region5
    $region4: #{tpu_custom_call.1} parent=1 // pred_region
      _
    $region5: #{tpu_custom_call.1} parent=1 // pred_fallthru
      _
    // Predicated region
    $region6: #{tpu_custom_call.1} parent=1 // pred_check
      _
    $region7: #{tpu_custom_call.1} parent=1 // pred_check_branch
      %21 = sbr.rel (0) target = $region9
    $region8: #{tpu_custom_call.1} parent=1 // pred_region
      _
    $region9: #{tpu_custom_call.1} parent=1 // pred_fallthru
      _
    // Predicated region
    $region10: #{tpu_custom_call.1} parent=1 // pred_check
      _
    $region11: #{tpu_custom_call.1} parent=1 // pred_check_branch
      %23 = sbr.rel (0) target = $region13
    $region12: #{tpu_custom_call.1} parent=1 // pred_region
      _
    $region13: #{tpu_custom_call.1} parent=1 // pred_fallthru
      _
    // Predicated region
    $region14: #{tpu_custom_call.1} parent=1 // pred_check
      _
    $region15: #{tpu_custom_call.1} parent=1 // pred_check_branch
      %25 = sbr.rel (0) target = $region17
    $region16: #{tpu_custom_call.1} parent=1 // pred_region
      _
    $region17: #{tpu_custom_call.1} parent=1 // pred_fallthru
      _
    // Predicated region
    $region18: #{tpu_custom_call.1} parent=1 // pred_check
      _
    $region19: #{tpu_custom_call.1} parent=1 // pred_check_branch
      %27 = sbr.rel (0) target = $region21
    $region20: #{tpu_custom_call.1} parent=1 // pred_region
      _
    $region21: #{tpu_custom_call.1} parent=1 // pred_fallthru
      _
    // Predicated region
    $region22: #{tpu_custom_call.1} parent=1 // pred_check
      _
    $region23: #{tpu_custom_call.1} parent=1 // pred_check_branch
      %29 = sbr.rel (0) target = $region25
    $region24: #{tpu_custom_call.1} parent=1 // pred_region
      _
    $region25: #{tpu_custom_call.1} parent=1 // pred_fallthru
      _
    // Predicated region
    $region26: #{tpu_custom_call.1} parent=1 // pred_check
      _
    $region27: #{tpu_custom_call.1} parent=1 // pred_check_branch
      %31 = sbr.rel (0) target = $region29
    $region28: #{tpu_custom_call.1} parent=1 // pred_region
      _
    $region29: #{tpu_custom_call.1} parent=1 // pred_fallthru
      _
    // Predicated region
    $region30: #{tpu_custom_call.1} parent=1 // pred_check
      _
    $region31: #{tpu_custom_call.1} parent=1 // pred_check_branch
      %33 = sbr.rel (0) target = $region33
    $region32: #{tpu_custom_call.1} parent=1 // pred_region
      _
    $region33: #{tpu_custom_call.1} parent=1 // pred_fallthru
      _
    // Predicated region
    $region34: #{tpu_custom_call.1} parent=1 // pred_check
      _
    $region35: #{tpu_custom_call.1} parent=1 // pred_check_branch
      %35 = sbr.rel (0) target = $region37
    $region36: #{tpu_custom_call.1} parent=1 // pred_region
      _
    $region37: #{tpu_custom_call.1} parent=1 // pred_fallthru
      _
    // Predicated region
    $region38: #{tpu_custom_call.1} parent=1 // pred_check
      _
    $region39: #{tpu_custom_call.1} parent=1 // pred_check_branch
      %37 = sbr.rel (0) target = $region41
    $region40: #{tpu_custom_call.1} parent=1 // pred_region
      %s39 = ssub.s32 2048, 2048
      %40 = vsyncadd [#allocation3], %s39
      %s41 = sshll.u32 [#allocation2], 4
      %s42 = int_to_ptr.vmem [resolvable:$true] %s41
      %47 = dma.hbm_to_vmem [thread:$0]  %s9, 2048, %s42, [#allocation3], 128, 128, 8
    $region41: #{tpu_custom_call.1} parent=1 // pred_fallthru
      _
    // Predicated region
    $region42: #{tpu_custom_call.1} parent=1 // pred_check
      _
    $region43: #{tpu_custom_call.1} parent=1 // pred_check_branch
      %49 = sbr.rel (0) target = $region45
    $region44: #{tpu_custom_call.1} parent=1 // pred_region
      _
    $region45: #{tpu_custom_call.1} parent=1 // pred_fallthru
      _
    // Predicated region
    $region46: #{tpu_custom_call.1} parent=1 // pred_check
      _
    $region47: #{tpu_custom_call.1} parent=1 // pred_check_branch
      %51 = sbr.rel (0) target = $region49
    $region48: #{tpu_custom_call.1} parent=1 // pred_region
      %52 = dma.done [#allocation3], 2048
    $region49: #{tpu_custom_call.1} parent=1 // pred_fallthru
      _
    %v54 = vld [vmem:[%s0] sm:$0xff]
    %v55 = vld [vmem:[%s0 + $0x8] sm:$0xff]
    %v56 = vld [vmem:[%s0 + $0x10] sm:$0xff]
    %v57 = vld [vmem:[%s0 + $0x18] sm:$0xff]
    %v58 = vld [vmem:[%s1] sm:$0xff]
    %v59 = vld [vmem:[%s1 + $0x8] sm:$0xff]
    %v60 = vld [vmem:[%s1 + $0x10] sm:$0xff]
    %v61 = vld [vmem:[%s1 + $0x18] sm:$0xff]
    %v62 = vld [vmem:[%s2] sm:$0x7f]
    %64 = vset.pattern.permute.xlu0 3
    %65 = vperm.xlu0 %64, %v58
    %v66 = vpop.permute.xlu0 %65
    %69 = vset.pattern.permute.xlu0 3
    %70 = vperm.xlu0 %69, %v59
    %v71 = vpop.permute.xlu0 %70
    %74 = vset.pattern.permute.xlu0 3
    %75 = vperm.xlu0 %74, %v60
    %v76 = vpop.permute.xlu0 %75
    %79 = vset.pattern.permute.xlu0 3
    %80 = vperm.xlu0 %79, %v61
    %v81 = vpop.permute.xlu0 %80
    %v83 = vlaneseq
    %v84 = vshrl.u32 %v83, 7
    %v85 = vsub.s32 3, %v84
    %v86 = vrot.slane %v62, %v85
    %v87 = vmul.f32 %v66, %v86
    %v88 = vmul.f32 %v71, %v86
    %v89 = vmul.f32 %v76, %v86
    %v90 = vmul.f32 %v81, %v86
    %91 = vset.pattern.permute.xlu0 4
    %92 = vperm.xlu0 %91, %v58
    %v93 = vpop.permute.xlu0 %92
    %95 = vset.pattern.permute.xlu0 4
    %96 = vperm.xlu0 %95, %v59
    %v97 = vpop.permute.xlu0 %96
    %99 = vset.pattern.permute.xlu0 4
    %100 = vperm.xlu0 %99, %v60
    %v101 = vpop.permute.xlu0 %100
    %103 = vset.pattern.permute.xlu0 4
    %104 = vperm.xlu0 %103, %v61
    %v105 = vpop.permute.xlu0 %104
    %v107 = vlaneseq
    %v108 = vshrl.u32 %v107, 7
    %v109 = vsub.s32 4, %v108
    %v110 = vrot.slane %v62, %v109
    %v111 = vmul.f32 %v93, %v110
    %v112 = vmul.f32 %v97, %v110
    %v113 = vmul.f32 %v101, %v110
    %v114 = vmul.f32 %v105, %v110
    %v115 = vadd.f32 %v87, %v111
    %v116 = vadd.f32 %v88, %v112
    %v117 = vadd.f32 %v89, %v113
    %v118 = vadd.f32 %v90, %v114
    %119 = vset.pattern.permute.xlu0 5
    %120 = vperm.xlu0 %119, %v58
    %v121 = vpop.permute.xlu0 %120
    %123 = vset.pattern.permute.xlu0 5
    %124 = vperm.xlu0 %123, %v59
    %v125 = vpop.permute.xlu0 %124
    %127 = vset.pattern.permute.xlu0 5
    %128 = vperm.xlu0 %127, %v60
    %v129 = vpop.permute.xlu0 %128
    %131 = vset.pattern.permute.xlu0 5
    %132 = vperm.xlu0 %131, %v61
    %v133 = vpop.permute.xlu0 %132
    %v135 = vlaneseq
    %v136 = vshrl.u32 %v135, 7
    %v137 = vsub.s32 5, %v136
    %v138 = vrot.slane %v62, %v137
    %v139 = vmul.f32 %v121, %v138
    %v140 = vmul.f32 %v125, %v138
    %v141 = vmul.f32 %v129, %v138
    %v142 = vmul.f32 %v133, %v138
    %v143 = vadd.f32 %v115, %v139
    %v144 = vadd.f32 %v116, %v140
    %v145 = vadd.f32 %v117, %v141
    %v146 = vadd.f32 %v118, %v142
    %147 = vset.pattern.permute.xlu0 6
    %148 = vperm.xlu0 %147, %v58
    %v149 = vpop.permute.xlu0 %148
    %151 = vset.pattern.permute.xlu0 6
    %152 = vperm.xlu0 %151, %v59
    %v153 = vpop.permute.xlu0 %152
    %155 = vset.pattern.permute.xlu0 6
    %156 = vperm.xlu0 %155, %v60
    %v157 = vpop.permute.xlu0 %156
    %159 = vset.pattern.permute.xlu0 6
    %160 = vperm.xlu0 %159, %v61
    %v161 = vpop.permute.xlu0 %160
    %v163 = vlaneseq
    %v164 = vshrl.u32 %v163, 7
    %v165 = vsub.s32 6, %v164
    %v166 = vrot.slane %v62, %v165
    %v167 = vmul.f32 %v149, %v166
    %v168 = vmul.f32 %v153, %v166
    %v169 = vmul.f32 %v157, %v166
    %v170 = vmul.f32 %v161, %v166
    %v171 = vadd.f32 %v143, %v167
    %v172 = vadd.f32 %v144, %v168
    %v173 = vadd.f32 %v145, %v169
    %v174 = vadd.f32 %v146, %v170
    %v175 = vlaneseq
    %v176 = vshrl.u32 %v175, 7
    %v177 = vadd.s32 %v176, 8
    %v178 = vadd.s32 %v176, 16
    %v179 = vadd.s32 %v176, 24
    %v180 = vlaneseq
    %v181 = vand.u32 %v180, 127
    %vm182 = vcmp.gt.f32.partialorder %v171, 0.9
    %vm183 = vcmp.gt.f32.partialorder %v172, 0.9
    %vm184 = vcmp.gt.f32.partialorder %v173, 0.9
    %vm185 = vcmp.gt.f32.partialorder %v174, 0.9
    %186 = vset.pattern.permute.xlu0 1
    %187 = vperm.xlu0 %186, %v58
    %v188 = vpop.permute.xlu0 %187
    %190 = vset.pattern.permute.xlu0 1
    %191 = vperm.xlu0 %190, %v59
    %v192 = vpop.permute.xlu0 %191
    %194 = vset.pattern.permute.xlu0 1
    %195 = vperm.xlu0 %194, %v60
    %v196 = vpop.permute.xlu0 %195
    %198 = vset.pattern.permute.xlu0 1
    %199 = vperm.xlu0 %198, %v61
    %v200 = vpop.permute.xlu0 %199
    %v202 = vlaneseq
    %v203 = vshrl.u32 %v202, 7
    %v204 = vsub.s32 1, %v203
    %v205 = vrot.slane %v62, %v204
    %vm206 = vcmp.eq.f32.partialorder %v188, %v205
    %vm207 = vcmp.eq.f32.partialorder %v192, %v205
    %vm208 = vcmp.eq.f32.partialorder %v196, %v205
    %vm209 = vcmp.eq.f32.partialorder %v200, %v205
    %vm210 = vmor %vm182, %vm206
    %vm211 = vmor %vm183, %vm207
    %vm212 = vmor %vm184, %vm208
    %vm213 = vmor %vm185, %vm209
    %214 = vset.pattern.permute.xlu0 2
    %215 = vperm.xlu0 %214, %v58
    %v216 = vpop.permute.xlu0 %215
    %218 = vset.pattern.permute.xlu0 2
    %219 = vperm.xlu0 %218, %v59
    %v220 = vpop.permute.xlu0 %219
    %222 = vset.pattern.permute.xlu0 2
    %223 = vperm.xlu0 %222, %v60
    %v224 = vpop.permute.xlu0 %223
    %226 = vset.pattern.permute.xlu0 2
    %227 = vperm.xlu0 %226, %v61
    %v228 = vpop.permute.xlu0 %227
    %v230 = vlaneseq
    %v231 = vshrl.u32 %v230, 7
    %v232 = vsub.s32 2, %v231
    %v233 = vrot.slane %v62, %v232
    %vm234 = vcmp.eq.f32.partialorder %v216, %v233
    %vm235 = vcmp.eq.f32.partialorder %v220, %v233
    %vm236 = vcmp.eq.f32.partialorder %v224, %v233
    %vm237 = vcmp.eq.f32.partialorder %v228, %v233
    %vm238 = vmand %vm210, %vm234
    %vm239 = vmand %vm211, %vm235
    %vm240 = vmand %vm212, %vm236
    %vm241 = vmand %vm213, %vm237
    %vm242 = vcmp.ne.s32.totalorder %v176, %v181
    %vm243 = vcmp.ne.s32.totalorder %v177, %v181
    %vm244 = vcmp.ne.s32.totalorder %v178, %v181
    %vm245 = vcmp.ne.s32.totalorder %v179, %v181
    %vm246 = vmand %vm238, %vm242
    %vm247 = vmand %vm239, %vm243
    %vm248 = vmand %vm240, %vm244
    %vm249 = vmand %vm241, %vm245
    %vm250 = vcmp.gt.f32.partialorder %v58, 0.5
    %vm251 = vcmp.gt.f32.partialorder %v59, 0.5
    %vm252 = vcmp.gt.f32.partialorder %v60, 0.5
    %vm253 = vcmp.gt.f32.partialorder %v61, 0.5
    %v254 = vsel %vm250, 1, 0
    %v255 = vsel %vm251, 1, 0
    %v256 = vsel %vm252, 1, 0
    %v257 = vsel %vm253, 1, 0
    %258 = vset.pattern.permute.xlu0 0
    %259 = vperm.xlu0 %258, %v254
    %v260 = vpop.permute.xlu0 %259
    %261 = vset.pattern.permute.xlu0 0
    %262 = vperm.xlu0 %261, %v255
    %v263 = vpop.permute.xlu0 %262
    %264 = vset.pattern.permute.xlu0 0
    %265 = vperm.xlu0 %264, %v256
    %v266 = vpop.permute.xlu0 %265
    %267 = vset.pattern.permute.xlu0 0
    %268 = vperm.xlu0 %267, %v257
    %v269 = vpop.permute.xlu0 %268
    %vm270 = vcmp.eq.s32.totalorder %v260, 1
    %vm271 = vcmp.eq.s32.totalorder %v263, 1
    %vm272 = vcmp.eq.s32.totalorder %v266, 1
    %vm273 = vcmp.eq.s32.totalorder %v269, 1
    %vm274 = vmand %vm246, %vm270
    %vm275 = vmand %vm247, %vm271
    %vm276 = vmand %vm248, %vm272
    %vm277 = vmand %vm249, %vm273
    %vm278 = vcmp.gt.f32.partialorder %v62, 0.5
    %v279 = vsel %vm278, 1, 0
    %v280 = vlaneseq
    %v281 = vshrl.u32 %v280, 7
    %v282 = vsub.s32 0, %v281
    %v283 = vrot.slane %v279, %v282
    %vm284 = vcmp.eq.s32.totalorder %v283, 1
    %vm285 = vmand %vm274, %vm284
    %vm286 = vmand %vm275, %vm284
    %vm287 = vmand %vm276, %vm284
    %vm288 = vmand %vm277, %vm284
    %v289 = vsel %vm285, 1.0, 0.0
    %v290 = vsel %vm286, 1.0, 0.0
    %v291 = vsel %vm287, 1.0, 0.0
    %v292 = vsel %vm288, 1.0, 0.0
    %vm293 = vcmask 261120
    %v294 = vsel %vm293, %v289, 0.0
    %295 = vadd.xlane.f32.xlu0 %v294
    %v296 = vpop.xlane.xlu0 %295
    %v297 = vsel %vm293, %v290, 0.0
    %298 = vadd.xlane.f32.xlu0 %v297
    %v299 = vpop.xlane.xlu0 %298
    %v300 = vsel %vm293, %v291, 0.0
    %301 = vadd.xlane.f32.xlu0 %v300
    %v302 = vpop.xlane.xlu0 %301
    %v303 = vsel %vm293, %v292, 0.0
    %304 = vadd.xlane.f32.xlu0 %v303
    %v305 = vpop.xlane.xlu0 %304
    %v306 = vmax.f32 %v296, 1.0
    %v307 = vmax.f32 %v299, 1.0
    %v308 = vmax.f32 %v302, 1.0
    %v309 = vmax.f32 %v305, 1.0
    %v310 = vrcp.pop %v306
    %v311 = vmul.f32 %v289, %v310
    %v312 = vrcp.pop %v307
    %v313 = vmul.f32 %v290, %v312
    %v314 = vrcp.pop %v308
    %v315 = vmul.f32 %v291, %v314
    %v316 = vrcp.pop %v309
    %v317 = vmul.f32 %v292, %v316
    %vm318 = vcmask 7168
    %v319 = vsel %vm318, %v58, 0.0
    %v320 = vsel %vm318, %v59, 0.0
    %v321 = vadd.f32 %v319, %v320
    %v322 = vsel %vm318, %v60, 0.0
    %v323 = vadd.f32 %v321, %v322
    %v324 = vsel %vm318, %v61, 0.0
    %v325 = vadd.f32 %v323, %v324
    %v326 = vrot.slane %v325, 4
    %v327 = vadd.f32 %v325, %v326
    %v328 = vrot.slane %v327, 2
    %v329 = vadd.f32 %v327, %v328
    %v330 = vrot.slane %v329, 1
    %v331 = vadd.f32 %v329, %v330
    %v332 = vmax.f32 %v331, 1.0
    %v333 = vrcp.pop %v332
    %v334 = vmul.f32 1.0, %v333
    %v335 = vld [vmem:[%s7] sm:$0x1]
    %v336 = vld [vmem:[%s8] sm:$0x1]
    %v338 = vsel %vm293, %v311, 0
    %v341 = vsel %vm293, %v313, 0
    %v344 = vsel %vm293, %v315, 0
    %v347 = vsel %vm293, %v317, 0
    %349 = vmatprep.subr.mxu0 0.0
    %350 = vmatpush1.msra.mxu0 0.0
    %351 = vmatprep.subr.mxu0 0.0
    %352 = vmatpush1.msra.mxu0 0.0
    %353 = vmatprep.subr.mxu0 0.0
    %354 = vmatpush1.msra.mxu0 0.0
    %355 = vmatprep.subr.mxu0 0.0
    %356 = vmatpush1.msra.mxu0 0.0
    %357 = vmatprep.subr.mxu0 0.0
    %358 = vmatpush1.msra.mxu0 0.0
    %359 = vmatprep.subr.mxu0 0.0
    %360 = vmatpush1.msra.mxu0 0.0
    %361 = vmatprep.subr.mxu0 0.0
    %362 = vmatpush1.msra.mxu0 0.0
    %363 = vmatprep.subr.mxu0 0.0
    %364 = vmatpush1.msra.mxu0 0.0
    %365 = vmatprep.subr.mxu0 0.0
    %366 = vmatpush1.msra.mxu0 0.0
    %367 = vmatprep.subr.mxu0 0.0
    %368 = vmatpush1.msra.mxu0 0.0
    %369 = vmatprep.subr.mxu0 0.0
    %370 = vmatpush1.msra.mxu0 0.0
    %371 = vmatprep.subr.mxu0 0.0
    %372 = vmatpush1.msra.mxu0 0.0
    %373 = vmatprep.subr.mxu0 0.0
    %374 = vmatpush1.msra.mxu0 %v57
    %375 = vmatprep.subr.mxu0 0.0
    %376 = vmatpush1.msra.mxu0 %v56
    %377 = vmatprep.subr.mxu0 0.0
    %378 = vmatpush1.msra.mxu0 %v55
    %379 = vmatprep.subr.mxu0 0.0
    %380 = vmatpush1.msra.mxu0 %v54
    %381 = vmatprep.subr.mxu0 0.0
    %382 = vmatpush2.msra.mxu0 0.0
    %383 = vmatprep.subr.mxu0 0.0
    %384 = vmatpush2.msra.mxu0 0.0
    %385 = vmatprep.subr.mxu0 0.0
    %386 = vmatpush2.msra.mxu0 0.0
    %387 = vmatprep.subr.mxu0 0.0
    %388 = vmatpush2.msra.mxu0 0.0
    %389 = vmatprep.subr.mxu0 0.0
    %390 = vmatpush2.msra.mxu0 0.0
    %391 = vmatprep.subr.mxu0 0.0
    %392 = vmatpush2.msra.mxu0 0.0
    %393 = vmatprep.subr.mxu0 0.0
    %394 = vmatpush2.msra.mxu0 0.0
    %395 = vmatprep.subr.mxu0 0.0
    %396 = vmatpush2.msra.mxu0 0.0
    %397 = vmatprep.subr.mxu0 0.0
    %398 = vmatpush2.msra.mxu0 0.0
    %399 = vmatprep.subr.mxu0 0.0
    %400 = vmatpush2.msra.mxu0 0.0
    %401 = vmatprep.subr.mxu0 0.0
    %402 = vmatpush2.msra.mxu0 0.0
    %403 = vmatprep.subr.mxu0 0.0
    %404 = vmatpush2.msra.mxu0 0.0
    %405 = vmatprep.subr.mxu0 0.0
    %406 = vmatpush2.msra.mxu0 0.0
    %407 = vmatprep.subr.mxu0 0.0
    %408 = vmatpush2.msra.mxu0 0.0
    %409 = vmatprep.subr.mxu0 0.0
    %410 = vmatpush2.msra.mxu0 0.0
    %411 = vmatprep.subr.mxu0 0.0
    %412 = vmatpush2.msra.mxu0 0.0
    %413 = vmatprep.mubr.f32.mxu0 0.0
    %414 = vmatmul.mubr.f32.gmra.mxu0 %v338
    %v415 = vpop.f32.mrf.mxu0
    %v416 = vadd.f32 0.0, %v415
    %v417 = vpop.f32.mrf.mxu0
    %418 = vmatprep.mubr.f32.mxu0 0.0
    %419 = vmatmul.mubr.f32.gmra.mxu0 %v341
    %v420 = vpop.f32.mrf.mxu0
    %v421 = vadd.f32 0.0, %v420
    %v422 = vpop.f32.mrf.mxu0
    %423 = vmatprep.mubr.f32.mxu0 0.0
    %424 = vmatmul.mubr.f32.gmra.mxu0 %v344
    %v425 = vpop.f32.mrf.mxu0
    %v426 = vadd.f32 0.0, %v425
    %v427 = vpop.f32.mrf.mxu0
    %428 = vmatprep.mubr.f32.mxu0 0.0
    %429 = vmatmul.mubr.f32.gmra.mxu0 %v347
    %v430 = vpop.f32.mrf.mxu0
    %v431 = vadd.f32 0.0, %v430
    %v432 = vpop.f32.mrf.mxu0
    %433 = vdwg.mxu0
    %438 = vrot.lane.b32.xlu0 %v54, 8
    %v439 = vpop.permute.xlu0 %438
    %440 = vrot.lane.b32.xlu0 %v55, 8
    %v441 = vpop.permute.xlu0 %440
    %442 = vrot.lane.b32.xlu0 %v56, 8
    %v443 = vpop.permute.xlu0 %442
    %444 = vrot.lane.b32.xlu0 %v57, 8
    %v445 = vpop.permute.xlu0 %444
    %vm450 = vcmask 64512
    %v451 = vsel %vm450, %v416, %v439
    %v452 = vsel %vm450, %v421, %v441
    %v453 = vsel %vm450, %v426, %v443
    %v454 = vsel %vm450, %v431, %v445
    %v455 = vpack.c.bf16 %v452, %v451
    %v456 = vpack.c.bf16 %v454, %v453
    %v457 = vld [vmem:[%s3] sm:$0xf]
    %v458 = vld [vmem:[%s3 + $0x4] sm:$0xf]
    %v459 = vld [vmem:[%s4] sm:$0x1]
    %v461 = vlaneseq
    %v462 = vshrl.u32 %v461, 7
    %v463 = vsub.s32 0, %v462
    %v464 = vrot.slane %v459, %v463
    %v468 = vunpack.c.l.b16 %v457
    %v469 = vunpack.c.l.b16 %v458
    %v470 = vpack.c.b16 %v469, %v468
    %vm472 = vcmask 130048
    %v474 = vsel %vm472, %v455, 0
    %v477 = vsel %vm472, %v456, 0
    %479 = vmatprep.subr.bf16.mxu0 0
    %480 = vmatpush1.bf16.msra.mxu0 0
    %481 = vmatprep.subr.bf16.mxu0 0
    %482 = vmatpush1.bf16.msra.mxu0 0
    %483 = vmatprep.subr.bf16.mxu0 0
    %484 = vmatpush1.bf16.msra.mxu0 0
    %485 = vmatprep.subr.bf16.mxu0 0
    %486 = vmatpush1.bf16.msra.mxu0 0
    %487 = vmatprep.subr.bf16.mxu0 0
    %488 = vmatpush1.bf16.msra.mxu0 0
    %489 = vmatprep.subr.bf16.mxu0 0
    %490 = vmatpush1.bf16.msra.mxu0 0
    %491 = vmatprep.subr.bf16.mxu0 0
    %492 = vmatpush1.bf16.msra.mxu0 0
    %493 = vmatprep.subr.bf16.mxu0 0
    %494 = vmatpush1.bf16.msra.mxu0 %v470
    %495 = vmatprep.subr.bf16.mxu0 0
    %496 = vmatpush2.bf16.msra.mxu0 0
    %497 = vmatprep.subr.bf16.mxu0 0
    %498 = vmatpush2.bf16.msra.mxu0 0
    %499 = vmatprep.subr.bf16.mxu0 0
    %500 = vmatpush2.bf16.msra.mxu0 0
    %501 = vmatprep.subr.bf16.mxu0 0
    %502 = vmatpush2.bf16.msra.mxu0 0
    %503 = vmatprep.subr.bf16.mxu0 0
    %504 = vmatpush2.bf16.msra.mxu0 0
    %505 = vmatprep.subr.bf16.mxu0 0
    %506 = vmatpush2.bf16.msra.mxu0 0
    %507 = vmatprep.subr.bf16.mxu0 0
    %508 = vmatpush2.bf16.msra.mxu0 0
    %509 = vmatprep.subr.bf16.mxu0 0
    %510 = vmatpush2.bf16.msra.mxu0 0
    %511 = vmatprep.mubr.bf16.mxu0 0
    %512 = vmatmul.mubr.bf16.gmra.mxu0 %v474
    %v513 = vpop.f32.mrf.mxu0
    %v514 = vadd.f32 %v464, %v513
    %v515 = vpop.f32.mrf.mxu0
    %v516 = vpop.f32.mrf.mxu0
    %v517 = vadd.f32 %v464, %v516
    %v518 = vpop.f32.mrf.mxu0
    %519 = vmatprep.mubr.bf16.mxu0 0
    %520 = vmatmul.mubr.bf16.gmra.mxu0 %v477
    %v521 = vpop.f32.mrf.mxu0
    %v522 = vadd.f32 %v464, %v521
    %v523 = vpop.f32.mrf.mxu0
    %v524 = vpop.f32.mrf.mxu0
    %v525 = vadd.f32 %v464, %v524
    %v526 = vpop.f32.mrf.mxu0
    %527 = vdwg.mxu0
    %v528 = vmax.f32 %v514, 0.0
    %v529 = vmax.f32 %v517, 0.0
    %v530 = vmax.f32 %v522, 0.0
    %v531 = vmax.f32 %v525, 0.0
    %532 = vset.pattern.permute.xlu0 0
    %533 = vperm.xlu0 %532, %v58
    %v534 = vpop.permute.xlu0 %533
    %536 = vset.pattern.permute.xlu0 0
    %537 = vperm.xlu0 %536, %v59
    %v538 = vpop.permute.xlu0 %537
    %540 = vset.pattern.permute.xlu0 0
    %541 = vperm.xlu0 %540, %v60
    %v542 = vpop.permute.xlu0 %541
    %544 = vset.pattern.permute.xlu0 0
    %545 = vperm.xlu0 %544, %v61
    %v546 = vpop.permute.xlu0 %545
    %v548 = vmul.f32 %v528, %v534
    %v549 = vmul.f32 %v529, %v538
    %v550 = vmul.f32 %v530, %v542
    %v551 = vmul.f32 %v531, %v546
    %v552 = vadd.f32 %v548, %v549
    %v553 = vadd.f32 %v552, %v550
    %v554 = vadd.f32 %v553, %v551
    %v555 = vrot.slane %v554, 4
    %v556 = vadd.f32 %v554, %v555
    %v557 = vrot.slane %v556, 2
    %v558 = vadd.f32 %v556, %v557
    %v559 = vrot.slane %v558, 1
    %v560 = vadd.f32 %v558, %v559
    %562 = vset.pattern.permute.xlu0 0
    %563 = vperm.xlu0 %562, %v334
    %v564 = vpop.permute.xlu0 %563
    %v566 = vmul.f32 %v560, %v564
    %v567 = vsub.f32 %v528, %v566
    %v568 = vsub.f32 %v529, %v566
    %v569 = vsub.f32 %v530, %v566
    %v570 = vsub.f32 %v531, %v566
    %v571 = vmul.f32 %v567, %v534
    %v572 = vmul.f32 %v568, %v538
    %v573 = vmul.f32 %v569, %v542
    %v574 = vmul.f32 %v570, %v546
    %v575 = vmul.f32 %v571, %v571
    %v576 = vmul.f32 %v572, %v572
    %v577 = vmul.f32 %v573, %v573
    %v578 = vmul.f32 %v574, %v574
    %v579 = vadd.f32 %v575, %v576
    %v580 = vadd.f32 %v579, %v577
    %v581 = vadd.f32 %v580, %v578
    %v582 = vrot.slane %v581, 4
    %v583 = vadd.f32 %v581, %v582
    %v584 = vrot.slane %v583, 2
    %v585 = vadd.f32 %v583, %v584
    %v586 = vrot.slane %v585, 1
    %v587 = vadd.f32 %v585, %v586
    %v588 = vmul.f32 %v587, %v564
    %v590 = vlaneseq
    %v591 = vshrl.u32 %v590, 7
    %v592 = vsub.s32 0, %v591
    %v593 = vrot.slane %v335, %v592
    %v595 = vmul.f32 %v593, %v567
    %v596 = vmul.f32 %v593, %v568
    %v597 = vmul.f32 %v593, %v569
    %v598 = vmul.f32 %v593, %v570
    %v599 = vadd.f32 %v588, 1e-05
    %v600 = vrsqrt.pop %v599
    %v601 = vmul.f32 %v595, %v600
    %v602 = vmul.f32 %v596, %v600
    %v603 = vmul.f32 %v597, %v600
    %v604 = vmul.f32 %v598, %v600
    %v606 = vlaneseq
    %v607 = vshrl.u32 %v606, 7
    %v608 = vsub.s32 0, %v607
    %v609 = vrot.slane %v336, %v608
    %v611 = vadd.f32 %v601, %v609
    %v612 = vadd.f32 %v602, %v609
    %v613 = vadd.f32 %v603, %v609
    %v614 = vadd.f32 %v604, %v609
    %615 = vmatprep.subr.mxu0 0.0
    %616 = vmatpush1.msra.mxu0 0.0
    %617 = vmatprep.subr.mxu0 0.0
    %618 = vmatpush1.msra.mxu0 0.0
    %619 = vmatprep.subr.mxu0 0.0
    %620 = vmatpush1.msra.mxu0 0.0
    %621 = vmatprep.subr.mxu0 0.0
    %622 = vmatpush1.msra.mxu0 0.0
    %623 = vmatprep.subr.mxu0 0.0
    %624 = vmatpush1.msra.mxu0 0.0
    %625 = vmatprep.subr.mxu0 0.0
    %626 = vmatpush1.msra.mxu0 0.0
    %627 = vmatprep.subr.mxu0 0.0
    %628 = vmatpush1.msra.mxu0 0.0
    %629 = vmatprep.subr.mxu0 0.0
    %630 = vmatpush1.msra.mxu0 0.0
    %631 = vmatprep.subr.mxu0 0.0
    %632 = vmatpush1.msra.mxu0 0.0
    %633 = vmatprep.subr.mxu0 0.0
    %634 = vmatpush1.msra.mxu0 0.0
    %635 = vmatprep.subr.mxu0 0.0
    %636 = vmatpush1.msra.mxu0 0.0
    %637 = vmatprep.subr.mxu0 0.0
    %638 = vmatpush1.msra.mxu0 0.0
    %639 = vmatprep.subr.mxu0 0.0
    %640 = vmatpush1.msra.mxu0 %v614
    %641 = vmatprep.subr.mxu0 0.0
    %642 = vmatpush1.msra.mxu0 %v613
    %643 = vmatprep.subr.mxu0 0.0
    %644 = vmatpush1.msra.mxu0 %v612
    %645 = vmatprep.subr.mxu0 0.0
    %646 = vmatpush1.msra.mxu0 %v611
    %647 = vmatprep.subr.mxu0 0.0
    %648 = vmatpush2.msra.mxu0 0.0
    %649 = vmatprep.subr.mxu0 0.0
    %650 = vmatpush2.msra.mxu0 0.0
    %651 = vmatprep.subr.mxu0 0.0
    %652 = vmatpush2.msra.mxu0 0.0
    %653 = vmatprep.subr.mxu0 0.0
    %654 = vmatpush2.msra.mxu0 0.0
    %655 = vmatprep.subr.mxu0 0.0
    %656 = vmatpush2.msra.mxu0 0.0
    %657 = vmatprep.subr.mxu0 0.0
    %658 = vmatpush2.msra.mxu0 0.0
    %659 = vmatprep.subr.mxu0 0.0
    %660 = vmatpush2.msra.mxu0 0.0
    %661 = vmatprep.subr.mxu0 0.0
    %662 = vmatpush2.msra.mxu0 0.0
    %663 = vmatprep.subr.mxu0 0.0
    %664 = vmatpush2.msra.mxu0 0.0
    %665 = vmatprep.subr.mxu0 0.0
    %666 = vmatpush2.msra.mxu0 0.0
    %667 = vmatprep.subr.mxu0 0.0
    %668 = vmatpush2.msra.mxu0 0.0
    %669 = vmatprep.subr.mxu0 0.0
    %670 = vmatpush2.msra.mxu0 0.0
    %671 = vmatprep.subr.mxu0 0.0
    %672 = vmatpush2.msra.mxu0 0.0
    %673 = vmatprep.subr.mxu0 0.0
    %674 = vmatpush2.msra.mxu0 0.0
    %675 = vmatprep.subr.mxu0 0.0
    %676 = vmatpush2.msra.mxu0 0.0
    %677 = vmatprep.subr.mxu0 0.0
    %678 = vmatpush2.msra.mxu0 0.0
    %679 = vmatprep.mubr.f32.mxu0 0.0
    %680 = vmatmul.mubr.f32.gmra.mxu0 %v338
    %v681 = vpop.f32.mrf.mxu0
    %v682 = vadd.f32 0.0, %v681
    %v683 = vpop.f32.mrf.mxu0
    %684 = vmatprep.mubr.f32.mxu0 0.0
    %685 = vmatmul.mubr.f32.gmra.mxu0 %v341
    %v686 = vpop.f32.mrf.mxu0
    %v687 = vadd.f32 0.0, %v686
    %v688 = vpop.f32.mrf.mxu0
    %689 = vmatprep.mubr.f32.mxu0 0.0
    %690 = vmatmul.mubr.f32.gmra.mxu0 %v344
    %v691 = vpop.f32.mrf.mxu0
    %v692 = vadd.f32 0.0, %v691
    %v693 = vpop.f32.mrf.mxu0
    %694 = vmatprep.mubr.f32.mxu0 0.0
    %695 = vmatmul.mubr.f32.gmra.mxu0 %v347
    %v696 = vpop.f32.mrf.mxu0
    %v697 = vadd.f32 0.0, %v696
    %v698 = vpop.f32.mrf.mxu0
    %699 = vdwg.mxu0
    %704 = vrot.lane.b32.xlu0 %v611, 32
    %v705 = vpop.permute.xlu0 %704
    %706 = vrot.lane.b32.xlu0 %v612, 32
    %v707 = vpop.permute.xlu0 %706
    %708 = vrot.lane.b32.xlu0 %v613, 32
    %v709 = vpop.permute.xlu0 %708
    %710 = vrot.lane.b32.xlu0 %v614, 32
    %v711 = vpop.permute.xlu0 %710
    %v716 = vsel %vm293, %v682, %v705
    %v717 = vsel %vm293, %v687, %v707
    %v718 = vsel %vm293, %v692, %v709
    %v719 = vsel %vm293, %v697, %v711
    %v720 = vpack.c.bf16 %v717, %v716
    %v721 = vpack.c.bf16 %v719, %v718
    %v722 = vld [vmem:[%s5] sm:$0xf]
    %v723 = vld [vmem:[%s5 + $0x4] sm:$0xf]
    %v724 = vld [vmem:[%s5 + $0x8] sm:$0xf]
    %v725 = vld [vmem:[%s5 + $0xc] sm:$0xf]
    %v726 = vld [vmem:[%s5 + $0x10] sm:$0xf]
    %v727 = vld [vmem:[%s5 + $0x14] sm:$0xf]
    %v728 = vld [vmem:[%s5 + $0x18] sm:$0xf]
    %v729 = vld [vmem:[%s5 + $0x1c] sm:$0xf]
    %v730 = vld [vmem:[%s6] sm:$0x1]
    %v732 = vlaneseq
    %v733 = vshrl.u32 %v732, 7
    %v734 = vsub.s32 0, %v733
    %v735 = vrot.slane %v730, %v734
    %v745 = vunpack.c.l.b16 %v722
    %v746 = vunpack.c.l.b16 %v723
    %v747 = vunpack.c.l.b16 %v724
    %v748 = vunpack.c.l.b16 %v725
    %v749 = vunpack.c.l.b16 %v726
    %v750 = vunpack.c.l.b16 %v727
    %v751 = vunpack.c.l.b16 %v728
    %v752 = vunpack.c.l.b16 %v729
    %v753 = vpack.c.b16 %v746, %v745
    %v754 = vpack.c.b16 %v748, %v747
    %v755 = vpack.c.b16 %v750, %v749
    %v756 = vpack.c.b16 %v752, %v751
    %vm761 = vcmask 523264
    %v763 = vsel %vm761, %v720, 0
    %v766 = vsel %vm761, %v721, 0
    %768 = vmatprep.subr.bf16.mxu0 0
    %769 = vmatpush1.bf16.msra.mxu0 0
    %770 = vmatprep.subr.bf16.mxu0 0
    %771 = vmatpush1.bf16.msra.mxu0 0
    %772 = vmatprep.subr.bf16.mxu0 0
    %773 = vmatpush1.bf16.msra.mxu0 0
    %774 = vmatprep.subr.bf16.mxu0 0
    %775 = vmatpush1.bf16.msra.mxu0 0
    %776 = vmatprep.subr.bf16.mxu0 0
    %777 = vmatpush1.bf16.msra.mxu0 %v756
    %778 = vmatprep.subr.bf16.mxu0 0
    %779 = vmatpush1.bf16.msra.mxu0 %v755
    %780 = vmatprep.subr.bf16.mxu0 0
    %781 = vmatpush1.bf16.msra.mxu0 %v754
    %782 = vmatprep.subr.bf16.mxu0 0
    %783 = vmatpush1.bf16.msra.mxu0 %v753
    %784 = vmatprep.subr.bf16.mxu0 0
    %785 = vmatpush2.bf16.msra.mxu0 0
    %786 = vmatprep.subr.bf16.mxu0 0
    %787 = vmatpush2.bf16.msra.mxu0 0
    %788 = vmatprep.subr.bf16.mxu0 0
    %789 = vmatpush2.bf16.msra.mxu0 0
    %790 = vmatprep.subr.bf16.mxu0 0
    %791 = vmatpush2.bf16.msra.mxu0 0
    %792 = vmatprep.subr.bf16.mxu0 0
    %793 = vmatpush2.bf16.msra.mxu0 0
    %794 = vmatprep.subr.bf16.mxu0 0
    %795 = vmatpush2.bf16.msra.mxu0 0
    %796 = vmatprep.subr.bf16.mxu0 0
    %797 = vmatpush2.bf16.msra.mxu0 0
    %798 = vmatprep.subr.bf16.mxu0 0
    %799 = vmatpush2.bf16.msra.mxu0 0
    %800 = vmatprep.mubr.bf16.mxu0 0
    %801 = vmatmul.mubr.bf16.gmra.mxu0 %v763
    %v802 = vpop.f32.mrf.mxu0
    %v803 = vadd.f32 %v735, %v802
    %v804 = vpop.f32.mrf.mxu0
    %v805 = vpop.f32.mrf.mxu0
    %v806 = vadd.f32 %v735, %v805
    %v807 = vpop.f32.mrf.mxu0
    %808 = vmatprep.mubr.bf16.mxu0 0
    %809 = vmatmul.mubr.bf16.gmra.mxu0 %v766
    %v810 = vpop.f32.mrf.mxu0
    %v811 = vadd.f32 %v735, %v810
    %v812 = vpop.f32.mrf.mxu0
    %v813 = vpop.f32.mrf.mxu0
    %v814 = vadd.f32 %v735, %v813
    %v815 = vpop.f32.mrf.mxu0
    %816 = vdwg.mxu0
    %v817 = vmax.f32 %v803, 0.0
    %v818 = vmax.f32 %v806, 0.0
    %v819 = vmax.f32 %v811, 0.0
    %v820 = vmax.f32 %v814, 0.0
    %v821 = vmul.f32 %v817, %v534
    %v822 = vmul.f32 %v818, %v538
    %v823 = vmul.f32 %v819, %v542
    %v824 = vmul.f32 %v820, %v546
    %v825 = vadd.f32 %v821, %v822
    %v826 = vadd.f32 %v825, %v823
    %v827 = vadd.f32 %v826, %v824
    %v828 = vrot.slane %v827, 4
    %v829 = vadd.f32 %v827, %v828
    %v830 = vrot.slane %v829, 2
    %v831 = vadd.f32 %v829, %v830
    %v832 = vrot.slane %v831, 1
    %v833 = vadd.f32 %v831, %v832
    %v834 = vmul.f32 %v833, %v564
    %v835 = vsub.f32 %v817, %v834
    %v836 = vsub.f32 %v818, %v834
    %v837 = vsub.f32 %v819, %v834
    %v838 = vsub.f32 %v820, %v834
    %v839 = vmul.f32 %v835, %v534
    %v840 = vmul.f32 %v836, %v538
    %v841 = vmul.f32 %v837, %v542
    %v842 = vmul.f32 %v838, %v546
    %v843 = vmul.f32 %v839, %v839
    %v844 = vmul.f32 %v840, %v840
    %v845 = vmul.f32 %v841, %v841
    %v846 = vmul.f32 %v842, %v842
    %v847 = vadd.f32 %v843, %v844
    %v848 = vadd.f32 %v847, %v845
    %v849 = vadd.f32 %v848, %v846
    %v850 = vrot.slane %v849, 4
    %v851 = vadd.f32 %v849, %v850
    %v852 = vrot.slane %v851, 2
    %v853 = vadd.f32 %v851, %v852
    %v854 = vrot.slane %v853, 1
    %v855 = vadd.f32 %v853, %v854
    %v856 = vmul.f32 %v855, %v564
    %v857 = vmul.f32 %v593, %v835
    %v858 = vmul.f32 %v593, %v836
    %v859 = vmul.f32 %v593, %v837
    %v860 = vmul.f32 %v593, %v838
    %v861 = vadd.f32 %v856, 1e-05
    %v862 = vrsqrt.pop %v861
    %v863 = vmul.f32 %v857, %v862
    %v864 = vmul.f32 %v858, %v862
    %v865 = vmul.f32 %v859, %v862
    %v866 = vmul.f32 %v860, %v862
    %v867 = vadd.f32 %v863, %v609
    %v868 = vadd.f32 %v864, %v609
    %v869 = vadd.f32 %v865, %v609
    %v870 = vadd.f32 %v866, %v609
    %871 = vmatprep.subr.mxu0 0.0
    %872 = vmatpush1.msra.mxu0 0.0
    %873 = vmatprep.subr.mxu0 0.0
    %874 = vmatpush1.msra.mxu0 0.0
    %875 = vmatprep.subr.mxu0 0.0
    %876 = vmatpush1.msra.mxu0 0.0
    %877 = vmatprep.subr.mxu0 0.0
    %878 = vmatpush1.msra.mxu0 0.0
    %879 = vmatprep.subr.mxu0 0.0
    %880 = vmatpush1.msra.mxu0 0.0
    %881 = vmatprep.subr.mxu0 0.0
    %882 = vmatpush1.msra.mxu0 0.0
    %883 = vmatprep.subr.mxu0 0.0
    %884 = vmatpush1.msra.mxu0 0.0
    %885 = vmatprep.subr.mxu0 0.0
    %886 = vmatpush1.msra.mxu0 0.0
    %887 = vmatprep.subr.mxu0 0.0
    %888 = vmatpush1.msra.mxu0 0.0
    %889 = vmatprep.subr.mxu0 0.0
    %890 = vmatpush1.msra.mxu0 0.0
    %891 = vmatprep.subr.mxu0 0.0
    %892 = vmatpush1.msra.mxu0 0.0
    %893 = vmatprep.subr.mxu0 0.0
    %894 = vmatpush1.msra.mxu0 0.0
    %895 = vmatprep.subr.mxu0 0.0
    %896 = vmatpush1.msra.mxu0 %v870
    %897 = vmatprep.subr.mxu0 0.0
    %898 = vmatpush1.msra.mxu0 %v869
    %899 = vmatprep.subr.mxu0 0.0
    %900 = vmatpush1.msra.mxu0 %v868
    %901 = vmatprep.subr.mxu0 0.0
    %902 = vmatpush1.msra.mxu0 %v867
    %903 = vmatprep.subr.mxu0 0.0
    %904 = vmatpush2.msra.mxu0 0.0
    %905 = vmatprep.subr.mxu0 0.0
    %906 = vmatpush2.msra.mxu0 0.0
    %907 = vmatprep.subr.mxu0 0.0
    %908 = vmatpush2.msra.mxu0 0.0
    %909 = vmatprep.subr.mxu0 0.0
    %910 = vmatpush2.msra.mxu0 0.0
    %911 = vmatprep.subr.mxu0 0.0
    %912 = vmatpush2.msra.mxu0 0.0
    %913 = vmatprep.subr.mxu0 0.0
    %914 = vmatpush2.msra.mxu0 0.0
    %915 = vmatprep.subr.mxu0 0.0
    %916 = vmatpush2.msra.mxu0 0.0
    %917 = vmatprep.subr.mxu0 0.0
    %918 = vmatpush2.msra.mxu0 0.0
    %919 = vmatprep.subr.mxu0 0.0
    %920 = vmatpush2.msra.mxu0 0.0
    %921 = vmatprep.subr.mxu0 0.0
    %922 = vmatpush2.msra.mxu0 0.0
    %923 = vmatprep.subr.mxu0 0.0
    %924 = vmatpush2.msra.mxu0 0.0
    %925 = vmatprep.subr.mxu0 0.0
    %926 = vmatpush2.msra.mxu0 0.0
    %927 = vmatprep.subr.mxu0 0.0
    %928 = vmatpush2.msra.mxu0 0.0
    %929 = vmatprep.subr.mxu0 0.0
    %930 = vmatpush2.msra.mxu0 0.0
    %931 = vmatprep.subr.mxu0 0.0
    %932 = vmatpush2.msra.mxu0 0.0
    %933 = vmatprep.subr.mxu0 0.0
    %934 = vmatpush2.msra.mxu0 0.0
    %935 = vmatprep.mubr.f32.mxu0 0.0
    %936 = vmatmul.mubr.f32.gmra.mxu0 %v338
    %v937 = vpop.f32.mrf.mxu0
    %v938 = vadd.f32 0.0, %v937
    %v939 = vpop.f32.mrf.mxu0
    %940 = vmatprep.mubr.f32.mxu0 0.0
    %941 = vmatmul.mubr.f32.gmra.mxu0 %v341
    %v942 = vpop.f32.mrf.mxu0
    %v943 = vadd.f32 0.0, %v942
    %v944 = vpop.f32.mrf.mxu0
    %945 = vmatprep.mubr.f32.mxu0 0.0
    %946 = vmatmul.mubr.f32.gmra.mxu0 %v344
    %v947 = vpop.f32.mrf.mxu0
    %v948 = vadd.f32 0.0, %v947
    %v949 = vpop.f32.mrf.mxu0
    %950 = vmatprep.mubr.f32.mxu0 0.0
    %951 = vmatmul.mubr.f32.gmra.mxu0 %v347
    %v952 = vpop.f32.mrf.mxu0
    %v953 = vadd.f32 0.0, %v952
    %v954 = vpop.f32.mrf.mxu0
    %955 = vdwg.mxu0
    %960 = vrot.lane.b32.xlu0 %v867, 32
    %v961 = vpop.permute.xlu0 %960
    %962 = vrot.lane.b32.xlu0 %v868, 32
    %v963 = vpop.permute.xlu0 %962
    %964 = vrot.lane.b32.xlu0 %v869, 32
    %v965 = vpop.permute.xlu0 %964
    %966 = vrot.lane.b32.xlu0 %v870, 32
    %v967 = vpop.permute.xlu0 %966
    %v972 = vsel %vm293, %v938, %v961
    %v973 = vsel %vm293, %v943, %v963
    %v974 = vsel %vm293, %v948, %v965
    %v975 = vsel %vm293, %v953, %v967
    %v976 = vpack.c.bf16 %v973, %v972
    %v977 = vpack.c.bf16 %v975, %v974
    %s978 = scalar_lea.vmem %s5, 32
    %v979 = vld [vmem:[%s978] sm:$0xf]
    %v980 = vld [vmem:[%s978 + $0x4] sm:$0xf]
    %v981 = vld [vmem:[%s978 + $0x8] sm:$0xf]
    %v982 = vld [vmem:[%s978 + $0xc] sm:$0xf]
    %v983 = vld [vmem:[%s978 + $0x10] sm:$0xf]
    %v984 = vld [vmem:[%s978 + $0x14] sm:$0xf]
    %v985 = vld [vmem:[%s978 + $0x18] sm:$0xf]
    %v986 = vld [vmem:[%s978 + $0x1c] sm:$0xf]
    %s987 = scalar_lea.vmem %s6, 1
    %v988 = vld [vmem:[%s987] sm:$0x1]
    %v990 = vlaneseq
    %v991 = vshrl.u32 %v990, 7
    %v992 = vsub.s32 0, %v991
    %v993 = vrot.slane %v988, %v992
    %v1003 = vunpack.c.l.b16 %v979
    %v1004 = vunpack.c.l.b16 %v980
    %v1005 = vunpack.c.l.b16 %v981
    %v1006 = vunpack.c.l.b16 %v982
    %v1007 = vunpack.c.l.b16 %v983
    %v1008 = vunpack.c.l.b16 %v984
    %v1009 = vunpack.c.l.b16 %v985
    %v1010 = vunpack.c.l.b16 %v986
    %v1011 = vpack.c.b16 %v1004, %v1003
    %v1012 = vpack.c.b16 %v1006, %v1005
    %v1013 = vpack.c.b16 %v1008, %v1007
    %v1014 = vpack.c.b16 %v1010, %v1009
    %v1020 = vsel %vm761, %v976, 0
    %v1023 = vsel %vm761, %v977, 0
    %1025 = vmatprep.subr.bf16.mxu0 0
    %1026 = vmatpush1.bf16.msra.mxu0 0
    %1027 = vmatprep.subr.bf16.mxu0 0
    %1028 = vmatpush1.bf16.msra.mxu0 0
    %1029 = vmatprep.subr.bf16.mxu0 0
    %1030 = vmatpush1.bf16.msra.mxu0 0
    %1031 = vmatprep.subr.bf16.mxu0 0
    %1032 = vmatpush1.bf16.msra.mxu0 0
    %1033 = vmatprep.subr.bf16.mxu0 0
    %1034 = vmatpush1.bf16.msra.mxu0 %v1014
    %1035 = vmatprep.subr.bf16.mxu0 0
    %1036 = vmatpush1.bf16.msra.mxu0 %v1013
    %1037 = vmatprep.subr.bf16.mxu0 0
    %1038 = vmatpush1.bf16.msra.mxu0 %v1012
    %1039 = vmatprep.subr.bf16.mxu0 0
    %1040 = vmatpush1.bf16.msra.mxu0 %v1011
    %1041 = vmatprep.subr.bf16.mxu0 0
    %1042 = vmatpush2.bf16.msra.mxu0 0
    %1043 = vmatprep.subr.bf16.mxu0 0
    %1044 = vmatpush2.bf16.msra.mxu0 0
    %1045 = vmatprep.subr.bf16.mxu0 0
    %1046 = vmatpush2.bf16.msra.mxu0 0
    %1047 = vmatprep.subr.bf16.mxu0 0
    %1048 = vmatpush2.bf16.msra.mxu0 0
    %1049 = vmatprep.subr.bf16.mxu0 0
    %1050 = vmatpush2.bf16.msra.mxu0 0
    %1051 = vmatprep.subr.bf16.mxu0 0
    %1052 = vmatpush2.bf16.msra.mxu0 0
    %1053 = vmatprep.subr.bf16.mxu0 0
    %1054 = vmatpush2.bf16.msra.mxu0 0
    %1055 = vmatprep.subr.bf16.mxu0 0
    %1056 = vmatpush2.bf16.msra.mxu0 0
    %1057 = vmatprep.mubr.bf16.mxu0 0
    %1058 = vmatmul.mubr.bf16.gmra.mxu0 %v1020
    %v1059 = vpop.f32.mrf.mxu0
    %v1060 = vadd.f32 %v993, %v1059
    %v1061 = vpop.f32.mrf.mxu0
    %v1062 = vpop.f32.mrf.mxu0
    %v1063 = vadd.f32 %v993, %v1062
    %v1064 = vpop.f32.mrf.mxu0
    %1065 = vmatprep.mubr.bf16.mxu0 0
    %1066 = vmatmul.mubr.bf16.gmra.mxu0 %v1023
    %v1067 = vpop.f32.mrf.mxu0
    %v1068 = vadd.f32 %v993, %v1067
    %v1069 = vpop.f32.mrf.mxu0
    %v1070 = vpop.f32.mrf.mxu0
    %v1071 = vadd.f32 %v993, %v1070
    %v1072 = vpop.f32.mrf.mxu0
    %1073 = vdwg.mxu0
    %v1074 = vmax.f32 %v1060, 0.0
    %v1075 = vmax.f32 %v1063, 0.0
    %v1076 = vmax.f32 %v1068, 0.0
    %v1077 = vmax.f32 %v1071, 0.0
    %v1078 = vmul.f32 %v1074, %v534
    %v1079 = vmul.f32 %v1075, %v538
    %v1080 = vmul.f32 %v1076, %v542
    %v1081 = vmul.f32 %v1077, %v546
    %v1082 = vadd.f32 %v1078, %v1079
    %v1083 = vadd.f32 %v1082, %v1080
    %v1084 = vadd.f32 %v1083, %v1081
    %v1085 = vrot.slane %v1084, 4
    %v1086 = vadd.f32 %v1084, %v1085
    %v1087 = vrot.slane %v1086, 2
    %v1088 = vadd.f32 %v1086, %v1087
    %v1089 = vrot.slane %v1088, 1
    %v1090 = vadd.f32 %v1088, %v1089
    %v1091 = vmul.f32 %v1090, %v564
    %v1092 = vsub.f32 %v1074, %v1091
    %v1093 = vsub.f32 %v1075, %v1091
    %v1094 = vsub.f32 %v1076, %v1091
    %v1095 = vsub.f32 %v1077, %v1091
    %v1096 = vmul.f32 %v1092, %v534
    %v1097 = vmul.f32 %v1093, %v538
    %v1098 = vmul.f32 %v1094, %v542
    %v1099 = vmul.f32 %v1095, %v546
    %v1100 = vmul.f32 %v1096, %v1096
    %v1101 = vmul.f32 %v1097, %v1097
    %v1102 = vmul.f32 %v1098, %v1098
    %v1103 = vmul.f32 %v1099, %v1099
    %v1104 = vadd.f32 %v1100, %v1101
    %v1105 = vadd.f32 %v1104, %v1102
    %v1106 = vadd.f32 %v1105, %v1103
    %v1107 = vrot.slane %v1106, 4
    %v1108 = vadd.f32 %v1106, %v1107
    %v1109 = vrot.slane %v1108, 2
    %v1110 = vadd.f32 %v1108, %v1109
    %v1111 = vrot.slane %v1110, 1
    %v1112 = vadd.f32 %v1110, %v1111
    %v1113 = vmul.f32 %v1112, %v564
    %v1114 = vmul.f32 %v593, %v1092
    %v1115 = vmul.f32 %v593, %v1093
    %v1116 = vmul.f32 %v593, %v1094
    %v1117 = vmul.f32 %v593, %v1095
    %v1118 = vadd.f32 %v1113, 1e-05
    %v1119 = vrsqrt.pop %v1118
    %v1120 = vmul.f32 %v1114, %v1119
    %v1121 = vmul.f32 %v1115, %v1119
    %v1122 = vmul.f32 %v1116, %v1119
    %v1123 = vmul.f32 %v1117, %v1119
    %v1124 = vadd.f32 %v1120, %v609
    %v1125 = vadd.f32 %v1121, %v609
    %v1126 = vadd.f32 %v1122, %v609
    %v1127 = vadd.f32 %v1123, %v609
    %v1128 = vmul.f32 %v1124, %v534
    %v1129 = vmul.f32 %v1125, %v538
    %v1130 = vmul.f32 %v1126, %v542
    %v1131 = vmul.f32 %v1127, %v546
    %v1132 = vrot.slane %v321, 4
    %v1133 = vadd.f32 %v321, %v1132
    %v1134 = vrot.slane %v1133, 2
    %v1135 = vadd.f32 %v1133, %v1134
    %v1136 = vrot.slane %v1135, 1
    %v1137 = vadd.f32 %v1135, %v1136
    %v1138 = vadd.f32 %v322, %v324
    %v1139 = vrot.slane %v1138, 4
    %v1140 = vadd.f32 %v1138, %v1139
    %v1141 = vrot.slane %v1140, 2
    %v1142 = vadd.f32 %v1140, %v1141
    %v1143 = vrot.slane %v1142, 1
    %v1144 = vadd.f32 %v1142, %v1143
    %v1145 = vadd.f32 %v1128, %v1129
    %v1146 = vrot.slane %v1145, 4
    %v1147 = vadd.f32 %v1145, %v1146
    %v1148 = vrot.slane %v1147, 2
    %v1149 = vadd.f32 %v1147, %v1148
    %v1150 = vrot.slane %v1149, 1
    %v1151 = vadd.f32 %v1149, %v1150
    %v1152 = vadd.f32 %v1130, %v1131
    %v1153 = vrot.slane %v1152, 4
    %v1154 = vadd.f32 %v1152, %v1153
    %v1155 = vrot.slane %v1154, 2
    %v1156 = vadd.f32 %v1154, %v1155
    %v1157 = vrot.slane %v1156, 1
    %v1158 = vadd.f32 %v1156, %v1157
    %v1159 = vmax.f32 %v1137, 1.0
    %v1160 = vmax.f32 %v1144, 1.0
    %1162 = vset.pattern.permute.xlu0 0
    %1163 = vperm.xlu0 %1162, %v1159
    %v1164 = vpop.permute.xlu0 %1163
    %1167 = vset.pattern.permute.xlu0 0
    %1168 = vperm.xlu0 %1167, %v1160
    %v1169 = vpop.permute.xlu0 %1168
    %v1171 = vrcp.pop %v1164
    %v1172 = vmul.f32 %v1151, %v1171
    %v1173 = vrcp.pop %v1169
    %v1174 = vmul.f32 %v1158, %v1173
    %v1175 = vld [vmem:[#allocation2] sm:$0xff]
    %v1176 = vld [vmem:[#allocation2 + $0x8] sm:$0xff]
    %v1177 = vld [vmem:[#allocation2 + $0x10] sm:$0xff]
    %v1178 = vld [vmem:[#allocation2 + $0x18] sm:$0xff]
    %v1179 = vld [vmem:[#allocation2 + $0x20] sm:$0xff]
    %v1180 = vld [vmem:[#allocation2 + $0x28] sm:$0xff]
    %v1181 = vld [vmem:[#allocation2 + $0x30] sm:$0xff]
    %v1182 = vld [vmem:[#allocation2 + $0x38] sm:$0xff]
    %v1183 = vld [vmem:[#allocation2 + $0x40] sm:$0xff]
    %v1184 = vld [vmem:[#allocation2 + $0x48] sm:$0xff]
    %v1185 = vld [vmem:[#allocation2 + $0x50] sm:$0xff]
    %v1186 = vld [vmem:[#allocation2 + $0x58] sm:$0xff]
    %v1187 = vld [vmem:[#allocation2 + $0x60] sm:$0xff]
    %v1188 = vld [vmem:[#allocation2 + $0x68] sm:$0xff]
    %v1189 = vld [vmem:[#allocation2 + $0x70] sm:$0xff]
    %v1190 = vld [vmem:[#allocation2 + $0x78] sm:$0xff]
    %v1191 = vld [vmem:[%s10] sm:$0x1]
    %v1193 = vlaneseq
    %v1194 = vshrl.u32 %v1193, 7
    %v1195 = vsub.s32 0, %v1194
    %v1196 = vrot.slane %v1191, %v1195
    %vm1200 = vcmask 1041409
    %v1201 = vsel %vm1200, %v1174, %v1172
    %1203 = vmatprep.subr.mxu0 0.0
    %1204 = vmatpush1.msra.mxu0 %v1190
    %1205 = vmatprep.subr.mxu0 0.0
    %1206 = vmatpush1.msra.mxu0 %v1189
    %1207 = vmatprep.subr.mxu0 0.0
    %1208 = vmatpush1.msra.mxu0 %v1188
    %1209 = vmatprep.subr.mxu0 0.0
    %1210 = vmatpush1.msra.mxu0 %v1187
    %1211 = vmatprep.subr.mxu0 0.0
    %1212 = vmatpush1.msra.mxu0 %v1186
    %1213 = vmatprep.subr.mxu0 0.0
    %1214 = vmatpush1.msra.mxu0 %v1185
    %1215 = vmatprep.subr.mxu0 0.0
    %1216 = vmatpush1.msra.mxu0 %v1184
    %1217 = vmatprep.subr.mxu0 0.0
    %1218 = vmatpush1.msra.mxu0 %v1183
    %1219 = vmatprep.subr.mxu0 0.0
    %1220 = vmatpush1.msra.mxu0 %v1182
    %1221 = vmatprep.subr.mxu0 0.0
    %1222 = vmatpush1.msra.mxu0 %v1181
    %1223 = vmatprep.subr.mxu0 0.0
    %1224 = vmatpush1.msra.mxu0 %v1180
    %1225 = vmatprep.subr.mxu0 0.0
    %1226 = vmatpush1.msra.mxu0 %v1179
    %1227 = vmatprep.subr.mxu0 0.0
    %1228 = vmatpush1.msra.mxu0 %v1178
    %1229 = vmatprep.subr.mxu0 0.0
    %1230 = vmatpush1.msra.mxu0 %v1177
    %1231 = vmatprep.subr.mxu0 0.0
    %1232 = vmatpush1.msra.mxu0 %v1176
    %1233 = vmatprep.subr.mxu0 0.0
    %1234 = vmatpush1.msra.mxu0 %v1175
    %1235 = vmatprep.subr.mxu0 0.0
    %1236 = vmatpush2.msra.mxu0 0.0
    %1237 = vmatprep.subr.mxu0 0.0
    %1238 = vmatpush2.msra.mxu0 0.0
    %1239 = vmatprep.subr.mxu0 0.0
    %1240 = vmatpush2.msra.mxu0 0.0
    %1241 = vmatprep.subr.mxu0 0.0
    %1242 = vmatpush2.msra.mxu0 0.0
    %1243 = vmatprep.subr.mxu0 0.0
    %1244 = vmatpush2.msra.mxu0 0.0
    %1245 = vmatprep.subr.mxu0 0.0
    %1246 = vmatpush2.msra.mxu0 0.0
    %1247 = vmatprep.subr.mxu0 0.0
    %1248 = vmatpush2.msra.mxu0 0.0
    %1249 = vmatprep.subr.mxu0 0.0
    %1250 = vmatpush2.msra.mxu0 0.0
    %1251 = vmatprep.subr.mxu0 0.0
    %1252 = vmatpush2.msra.mxu0 0.0
    %1253 = vmatprep.subr.mxu0 0.0
    %1254 = vmatpush2.msra.mxu0 0.0
    %1255 = vmatprep.subr.mxu0 0.0
    %1256 = vmatpush2.msra.mxu0 0.0
    %1257 = vmatprep.subr.mxu0 0.0
    %1258 = vmatpush2.msra.mxu0 0.0
    %1259 = vmatprep.subr.mxu0 0.0
    %1260 = vmatpush2.msra.mxu0 0.0
    %1261 = vmatprep.subr.mxu0 0.0
    %1262 = vmatpush2.msra.mxu0 0.0
    %1263 = vmatprep.subr.mxu0 0.0
    %1264 = vmatpush2.msra.mxu0 0.0
    %1265 = vmatprep.subr.mxu0 0.0
    %1266 = vmatpush2.msra.mxu0 0.0
    %1267 = vmatprep.mubr.f32.mxu0 0.0
    %1268 = vmatmul.mubr.f32.gmra.mxu0 %v1201
    %v1269 = vpop.f32.mrf.mxu0
    %v1270 = vadd.f32 %v1196, %v1269
    %v1271 = vpop.f32.mrf.mxu0
    %1272 = vdwg.mxu0
    %1273 = vst [vmem:[#allocation5] sm:$0x3] %v1270
    // Predicated region
    $region50: #{tpu_custom_call.1} parent=1 // pred_check
      _
    $region51: #{tpu_custom_call.1} parent=1 // pred_check_branch
      %1275 = sbr.rel (0) target = $region53
    $region52: #{tpu_custom_call.1} parent=1 // pred_region
      %s1277 = ssub.s32 32, 32
      %1278 = vsyncadd [#allocation4], %s1277
      %s1280 = sshll.u32 [#allocation5], 4
      %s1281 = int_to_ptr.vmem [resolvable:$true] %s1280
      %1283 = dma.vmem_to_hbm [thread:$0]  %s1281, 32, %s11, [#allocation4]
    $region53: #{tpu_custom_call.1} parent=1 // pred_fallthru
      _
    // Predicated region
    $region54: #{tpu_custom_call.1} parent=1 // pred_check
      _
    $region55: #{tpu_custom_call.1} parent=1 // pred_check_branch
      %1285 = sbr.rel (0) target = $region57
    $region56: #{tpu_custom_call.1} parent=1 // pred_region
      %1286 = dma.done [#allocation4], 32
    $region57: #{tpu_custom_call.1} parent=1 // pred_fallthru
      _
    %1287 = vsyncpa [#allocation3], 1
    %1288 = vsyncpa [#allocation4], 1

</llo_original>
